<compile_context>
chip_gen: v6e
topology: v6e:2x2x1
jax: 0.10.0
libtpu: 0.0.40
codegen_flags: <defaults>
</compile_context>

<pallas_src>
import jax
import jax.numpy as jnp
import numpy as np
from jax import lax
from jax.experimental import pallas as pl
from jax.experimental.pallas import tpu as pltpu

# ---- hyperparameters (the module's `params` dict) ----
PARAMS = dict(hidden_size=32, num_layers=2, dropout=0.0, bidirectional=False,
              embedding_dim=16, teacher_forcing=1.0)
INPUT_DIM = 8
NUM_SEQ_LABELS = 24
BATCH = 2
SEQ_LEN = 8

H = PARAMS['hidden_size']          # 32
L = PARAMS['num_layers']           # 2
E = PARAMS['embedding_dim']        # 16
V = NUM_SEQ_LABELS                 # 24
DIN = INPUT_DIM                    # 8
G = 3 * H                          # 96  packed gate axis (r | z | n)
BP = 8                             # batch padded to one sublane tile
EP = 32                            # layer-input dim padded so both layers share [32, G] wih
VP = 32                            # vocab rows of one-hot / emb table padded
VPAD = 128                         # output vocab axis padded to one lane tile


def _make_kernel(T):
    """Build the Pallas kernel body for a fixed (static) sequence length."""
    TB = T * BP

    def kernel(tok_ref, shared_ref, emb_ref, w_ref, hsl_ref, bias_ref,
               wout_ref, bout_ref, out_ref):
        # ---- in-kernel embedding lookup: one-hot [TB, VP] @ emb [VP, EP] ----
        tok = tok_ref[...]                                          # [TB, 1] i32
        iota_v = lax.broadcasted_iota(jnp.int32, (TB, VP), 1)
        onehot = jnp.where(tok == iota_v, 1.0, 0.0).astype(jnp.float32)
        x_seq = jnp.dot(onehot, emb_ref[...],
                        preferred_element_type=jnp.float32)         # [TB, EP]

        shared = shared_ref[...]                                    # [BP, DIN]

        for l in range(L):                     # static loop over GRU layers
            wblk = w_ref[l]                    # [EP, 256]
            wih = wblk[:, 0:G]                 # [EP, G]   (layer-0 rows E: zero)
            whh = wblk[:, 128:128 + G]         # [H,  G]   lane-tile aligned
            bblk = bias_ref[l]                 # [2, G]
            gxb = bblk[0:1, :]                 # b_ir+b_hr | b_iz+b_hz | b_in
            bhn = bblk[1:2, :]                 # 0 | 0 | b_hn
            hblk = hsl_ref[l]                  # [DIN+1, H]
            whsl = hblk[0:DIN, :]              # [DIN, H]
            bhsl = hblk[DIN:DIN + 1, :]        # [1, H]

            # fused batched input-gate transform (off the serial t-chain)
            gx = jnp.dot(x_seq, wih, preferred_element_type=jnp.float32) + gxb

            # initial hidden state for this layer (hidden_state_layer linear)
            h = jnp.dot(shared, whsl, preferred_element_type=jnp.float32) + bhsl

            bhn_b = jnp.broadcast_to(bhn, (BP, G))    # hoisted out of t-loop

            # ---- fully unrolled recurrence, h carried in vregs ----
            outs = []
            for t in range(T):
                gx_t = gx[t * BP:(t + 1) * BP, :]     # sublane-tile aligned slice
                # single packed (r|z|n) hidden matmul per step
                gh = jnp.dot(h, whh, preferred_element_type=jnp.float32) + bhn_b
                srz = jax.nn.sigmoid(gx_t[:, 0:2 * H] + gh[:, 0:2 * H])
                r = srz[:, 0:H]
                z = srz[:, H:2 * H]
                n = jnp.tanh(gx_t[:, 2 * H:] + r * gh[:, 2 * H:])
                h = (1.0 - z) * n + z * h
                outs.append(h)
            # each piece is a full [8, 32] sublane tile -> aligned concat
            x_seq = jnp.concatenate(outs, axis=0)     # [TB, H] -> next layer

        # ---- output projection, hoisted out of the recurrence, lane-dense ----
        out_ref[...] = (jnp.dot(x_seq, wout_ref[...],
                                preferred_element_type=jnp.float32)
                        + bout_ref[...])

    return kernel


def init_params(key):
    keys = jax.random.split(key, 5 + L)

    def u(k, shape, scale=0.2):
        return jax.random.uniform(k, shape, jnp.float32, -scale, scale)

    emb = u(keys[0], (V, E))
    emb = emb.at[0].set(0.0)                 # padding_idx=0 -> zero row
    W_hsl = u(keys[1], (DIN, L * H))         # layout: [in, out]
    b_hsl = u(keys[2], (L * H,))
    Wout = u(keys[3], (H, V))
    bout = u(keys[4], (V,))
    gru = []
    for l in range(L):
        in_l = E if l == 0 else H
        k4 = jax.random.split(keys[5 + l], 4)
        gru.append(dict(
            wih=u(k4[0], (in_l, 3 * H)),     # gate order (r, z, n)
            whh=u(k4[1], (H, 3 * H)),
            bih=u(k4[2], (3 * H,)),
            bhh=u(k4[3], (3 * H,)),
        ))
    return dict(emb=emb, W_hsl=W_hsl, b_hsl=b_hsl, Wout=Wout, bout=bout, gru=gru)


def prepare_params(params):
    """One-time repacking of module weights into kernel-friendly slabs."""
    f32 = jnp.float32

    # embedding table padded to [VP, EP]; padded rows/cols are zero
    emb_pad = jnp.zeros((VP, EP), f32).at[:V, :E].set(params['emb'])

    # hidden_state_layer weights, per GRU layer: [L, DIN+1, H] (last row = bias)
    whsl = params['W_hsl'].reshape(DIN, L, H).transpose(1, 0, 2)   # [L, DIN, H]
    bhsl = params['b_hsl'].reshape(L, 1, H)
    hsl_slab = jnp.concatenate([whsl, bhsl], axis=1)               # [L, DIN+1, H]

    # per-layer GRU weight slab: lanes 0:96 = wih (zero-padded rows for layer 0),
    # lanes 128:224 = whh.  Biases: row 0 folded gx bias, row 1 packed b_hn.
    w_slab = jnp.zeros((L, EP, 2 * 128), f32)
    bias_slab = jnp.zeros((L, 2, G), f32)
    for l in range(L):
        g = params['gru'][l]
        in_l = E if l == 0 else H
        w_slab = w_slab.at[l, :in_l, 0:G].set(g['wih'])
        w_slab = w_slab.at[l, :H, 128:128 + G].set(g['whh'])
        gxb = jnp.concatenate([g['bih'][:2 * H] + g['bhh'][:2 * H],
                               g['bih'][2 * H:]])
        bias_slab = bias_slab.at[l, 0, :].set(gxb)
        bias_slab = bias_slab.at[l, 1, 2 * H:].set(g['bhh'][2 * H:])

    # output projection padded to a full 128-lane tile (padded cols must stay 0)
    wout_pad = jnp.zeros((H, VPAD), f32).at[:, :V].set(params['Wout'])
    bout_pad = jnp.zeros((1, VPAD), f32).at[0, :V].set(params['bout'])

    return dict(emb_pad=emb_pad, hsl_slab=hsl_slab, w_slab=w_slab,
                bias_slab=bias_slab, wout_pad=wout_pad, bout_pad=bout_pad)


@jax.jit
def bigru_decoder_forward(packed, shared_hidden_state, gt_tcr_seq):
    B, S = gt_tcr_seq.shape
    T = S - 1

    # teacher-forcing tokens: time-major, batch padded to BP with padding idx 0
    tok = gt_tcr_seq[:, :-1].astype(jnp.int32)                     # [B, T]
    tok_pad = jnp.zeros((T, BP), jnp.int32).at[:, :B].set(jnp.transpose(tok))
    tok_v = tok_pad.reshape(T * BP, 1)
    shared_pad = (jnp.zeros((BP, DIN), jnp.float32)
                  .at[:B, :].set(shared_hidden_state.astype(jnp.float32)))

    kernel = _make_kernel(T)
    vmem = pl.BlockSpec(memory_space=pltpu.MemorySpace.VMEM)
    out_flat = pl.pallas_call(
        kernel,
        out_shape=jax.ShapeDtypeStruct((T * BP, VPAD), jnp.float32),
        in_specs=[vmem] * 8,
        out_specs=vmem,
    )(tok_v, shared_pad, packed['emb_pad'], packed['w_slab'],
      packed['hsl_slab'], packed['bias_slab'], packed['wout_pad'],
      packed['bout_pad'])

    # drop batch padding + vocab padding, back to batch-first [B, T, V]
    out = out_flat.reshape(T, BP, VPAD)[:, :B, :V]                 # [T, B, V]
    return jnp.transpose(out, (1, 0, 2))                           # [B, T, V]


def reference_forward(params, shared, gt_tcr_seq):
    """Pure-JAX reference mirroring torch semantics (teacher-forcing path)."""
    B, S = gt_tcr_seq.shape

    h_lin = shared @ params['W_hsl'] + params['b_hsl']             # [B, L*H]
    h0 = h_lin.reshape(B, L, H).transpose(1, 0, 2)                 # [L, B, H]

    x = jnp.take(params['emb'], gt_tcr_seq[:, :-1], axis=0)        # [B, T, E]
    inp = jnp.transpose(x, (1, 0, 2))                              # [T, B, E]
    for l in range(L):
        g = params['gru'][l]

        def step(h, x_t, g=g):
            gx = x_t @ g['wih'] + g['bih']
            gh = h @ g['whh'] + g['bhh']
            r = jax.nn.sigmoid(gx[:, :H] + gh[:, :H])
            z = jax.nn.sigmoid(gx[:, H:2 * H] + gh[:, H:2 * H])
            n = jnp.tanh(gx[:, 2 * H:] + r * gh[:, 2 * H:])
            h_new = (1.0 - z) * n + z * h
            return h_new, h_new

        _, inp = lax.scan(step, h0[l], inp)                        # [T, B, H]
    logits = inp @ params['Wout'] + params['bout']                 # [T, B, V]
    return jnp.transpose(logits, (1, 0, 2))                        # [B, T, V]


if __name__ == "__main__":
    key = jax.random.PRNGKey(0)
    kp, ks, kt = jax.random.split(key, 3)
    params = init_params(kp)
    packed = prepare_params(params)          # one-time weight repack (hoisted)

    shared = jax.random.normal(ks, (BATCH, INPUT_DIM), jnp.float32)
    tokens = jax.random.randint(kt, (BATCH, SEQ_LEN), 0, NUM_SEQ_LABELS, jnp.int32)
    tokens = tokens.at[:, 0].set(1)          # start symbol (non-padding)

    out = bigru_decoder_forward(packed, shared, tokens)
    out = jax.block_until_ready(out)

    ref = reference_forward(params, shared, tokens)
    assert out.shape == (BATCH, SEQ_LEN - 1, NUM_SEQ_LABELS)
    np.testing.assert_allclose(np.asarray(out), np.asarray(ref),
                               rtol=2e-5, atol=2e-5)
    print("KERNEL_OK")
</pallas_src>

<mosaic_0001>
module attributes {stable_mosaic.version = 11 : i64} {
  func.func @kernel(%arg0: memref<56x1xi32, #tpu.memory_space<vmem>>, %arg1: memref<8x8xf32, #tpu.memory_space<vmem>>, %arg2: memref<32x32xf32, #tpu.memory_space<vmem>>, %arg3: memref<2x32x256xf32, #tpu.memory_space<vmem>>, %arg4: memref<2x9x32xf32, #tpu.memory_space<vmem>>, %arg5: memref<2x2x96xf32, #tpu.memory_space<vmem>>, %arg6: memref<32x128xf32, #tpu.memory_space<vmem>>, %arg7: memref<1x128xf32, #tpu.memory_space<vmem>>, %arg8: memref<56x128xf32, #tpu.memory_space<vmem>>) attributes {dimension_semantics = [], scalar_prefetch = 0 : i64, scratch_operands = 0 : i64, tpu.core_type = #tpu.core_type<tc>} {
    %c0 = arith.constant 0 : index
    %c0_0 = arith.constant 0 : index
    %0 = vector.load %arg0[%c0, %c0_0] : memref<56x1xi32, #tpu.memory_space<vmem>>, vector<56x1xi32>
    %1 = tpu.iota {dimensions = array<i32: 1>} : vector<56x32xi32>
    %2 = vector.broadcast %0 : vector<56x1xi32> to vector<56x32xi32>
    %3 = arith.cmpi eq, %2, %1 : vector<56x32xi32>
    %cst = arith.constant 1.000000e+00 : f32
    %cst_1 = arith.constant 0.000000e+00 : f32
    %4 = vector.broadcast %cst : f32 to vector<56x32xf32>
    %5 = vector.broadcast %cst_1 : f32 to vector<56x32xf32>
    %6 = arith.select %3, %4, %5 : vector<56x32xi1>, vector<56x32xf32>
    %c0_2 = arith.constant 0 : index
    %c0_3 = arith.constant 0 : index
    %7 = vector.load %arg2[%c0_2, %c0_3] : memref<32x32xf32, #tpu.memory_space<vmem>>, vector<32x32xf32>
    %cst_4 = arith.constant dense<0.000000e+00> : vector<56x32xf32>
    %8 = tpu.matmul %6, %7, %cst_4 {dimension_numbers = #tpu.dot_dimension_numbers<[1], [0], [0], [1], [0, 0, 1, 1], [], []>} : vector<56x32xf32>, vector<32x32xf32>, vector<56x32xf32> -> vector<56x32xf32>
    %c0_5 = arith.constant 0 : index
    %c0_6 = arith.constant 0 : index
    %9 = vector.load %arg1[%c0_5, %c0_6] : memref<8x8xf32, #tpu.memory_space<vmem>>, vector<8x8xf32>
    %c0_7 = arith.constant 0 : index
    %c0_8 = arith.constant 0 : index
    %c0_9 = arith.constant 0 : index
    %10 = vector.load %arg3[%c0_7, %c0_8, %c0_9] : memref<2x32x256xf32, #tpu.memory_space<vmem>>, vector<1x32x256xf32>
    %11 = vector.shape_cast %10 : vector<1x32x256xf32> to vector<32x256xf32>
    %12 = vector.extract_strided_slice %11 {offsets = [0, 0], sizes = [32, 96], strides = [1, 1]} : vector<32x256xf32> to vector<32x96xf32>
    %13 = vector.extract_strided_slice %11 {offsets = [0, 128], sizes = [32, 96], strides = [1, 1]} : vector<32x256xf32> to vector<32x96xf32>
    %c0_10 = arith.constant 0 : index
    %c0_11 = arith.constant 0 : index
    %c0_12 = arith.constant 0 : index
    %14 = vector.load %arg5[%c0_10, %c0_11, %c0_12] : memref<2x2x96xf32, #tpu.memory_space<vmem>>, vector<1x2x96xf32>
    %15 = vector.shape_cast %14 : vector<1x2x96xf32> to vector<2x96xf32>
    %16 = vector.extract_strided_slice %15 {offsets = [0, 0], sizes = [1, 96], strides = [1, 1]} : vector<2x96xf32> to vector<1x96xf32>
    %17 = vector.extract_strided_slice %15 {offsets = [1, 0], sizes = [1, 96], strides = [1, 1]} : vector<2x96xf32> to vector<1x96xf32>
    %c0_13 = arith.constant 0 : index
    %c0_14 = arith.constant 0 : index
    %c0_15 = arith.constant 0 : index
    %18 = vector.load %arg4[%c0_13, %c0_14, %c0_15] : memref<2x9x32xf32, #tpu.memory_space<vmem>>, vector<1x9x32xf32>
    %19 = vector.shape_cast %18 : vector<1x9x32xf32> to vector<9x32xf32>
    %20 = vector.extract_strided_slice %19 {offsets = [0, 0], sizes = [8, 32], strides = [1, 1]} : vector<9x32xf32> to vector<8x32xf32>
    %21 = vector.extract_strided_slice %19 {offsets = [8, 0], sizes = [1, 32], strides = [1, 1]} : vector<9x32xf32> to vector<1x32xf32>
    %cst_16 = arith.constant dense<0.000000e+00> : vector<56x96xf32>
    %22 = tpu.matmul %8, %12, %cst_16 {dimension_numbers = #tpu.dot_dimension_numbers<[1], [0], [0], [1], [0, 0, 1, 1], [], []>} : vector<56x32xf32>, vector<32x96xf32>, vector<56x96xf32> -> vector<56x96xf32>
    %23 = vector.broadcast %16 : vector<1x96xf32> to vector<56x96xf32>
    %24 = arith.addf %22, %23 : vector<56x96xf32>
    %cst_17 = arith.constant dense<0.000000e+00> : vector<8x32xf32>
    %25 = tpu.matmul %9, %20, %cst_17 {dimension_numbers = #tpu.dot_dimension_numbers<[1], [0], [0], [1], [0, 0, 1, 1], [], []>} : vector<8x8xf32>, vector<8x32xf32>, vector<8x32xf32> -> vector<8x32xf32>
    %26 = vector.broadcast %21 : vector<1x32xf32> to vector<8x32xf32>
    %27 = arith.addf %25, %26 : vector<8x32xf32>
    %28 = vector.shape_cast %17 : vector<1x96xf32> to vector<1x96xf32>
    %29 = vector.broadcast %28 : vector<1x96xf32> to vector<8x96xf32>
    %30 = vector.extract_strided_slice %24 {offsets = [0, 0], sizes = [8, 96], strides = [1, 1]} : vector<56x96xf32> to vector<8x96xf32>
    %cst_18 = arith.constant dense<0.000000e+00> : vector<8x96xf32>
    %31 = tpu.matmul %27, %13, %cst_18 {dimension_numbers = #tpu.dot_dimension_numbers<[1], [0], [0], [1], [0, 0, 1, 1], [], []>} : vector<8x32xf32>, vector<32x96xf32>, vector<8x96xf32> -> vector<8x96xf32>
    %32 = arith.addf %31, %29 : vector<8x96xf32>
    %33 = vector.extract_strided_slice %30 {offsets = [0, 0], sizes = [8, 64], strides = [1, 1]} : vector<8x96xf32> to vector<8x64xf32>
    %34 = vector.extract_strided_slice %32 {offsets = [0, 0], sizes = [8, 64], strides = [1, 1]} : vector<8x96xf32> to vector<8x64xf32>
    %35 = arith.addf %33, %34 : vector<8x64xf32>
    %36 = arith.negf %35 : vector<8x64xf32>
    %37 = math.exp %36 : vector<8x64xf32>
    %cst_19 = arith.constant 1.000000e+00 : f32
    %38 = vector.broadcast %cst_19 : f32 to vector<8x64xf32>
    %39 = arith.addf %38, %37 : vector<8x64xf32>
    %40 = arith.divf %38, %39 : vector<8x64xf32>
    %41 = vector.extract_strided_slice %40 {offsets = [0, 0], sizes = [8, 32], strides = [1, 1]} : vector<8x64xf32> to vector<8x32xf32>
    %42 = vector.extract_strided_slice %40 {offsets = [0, 32], sizes = [8, 32], strides = [1, 1]} : vector<8x64xf32> to vector<8x32xf32>
    %43 = vector.extract_strided_slice %30 {offsets = [0, 64], sizes = [8, 32], strides = [1, 1]} : vector<8x96xf32> to vector<8x32xf32>
    %44 = vector.extract_strided_slice %32 {offsets = [0, 64], sizes = [8, 32], strides = [1, 1]} : vector<8x96xf32> to vector<8x32xf32>
    %45 = arith.mulf %41, %44 : vector<8x32xf32>
    %46 = arith.addf %43, %45 : vector<8x32xf32>
    %47 = math.tanh %46 : vector<8x32xf32>
    %cst_20 = arith.constant 1.000000e+00 : f32
    %48 = vector.broadcast %cst_20 : f32 to vector<8x32xf32>
    %49 = arith.subf %48, %42 : vector<8x32xf32>
    %50 = arith.mulf %49, %47 : vector<8x32xf32>
    %51 = arith.mulf %42, %27 : vector<8x32xf32>
    %52 = arith.addf %50, %51 : vector<8x32xf32>
    %53 = vector.extract_strided_slice %24 {offsets = [8, 0], sizes = [8, 96], strides = [1, 1]} : vector<56x96xf32> to vector<8x96xf32>
    %cst_21 = arith.constant dense<0.000000e+00> : vector<8x96xf32>
    %54 = tpu.matmul %52, %13, %cst_21 {dimension_numbers = #tpu.dot_dimension_numbers<[1], [0], [0], [1], [0, 0, 1, 1], [], []>} : vector<8x32xf32>, vector<32x96xf32>, vector<8x96xf32> -> vector<8x96xf32>
    %55 = arith.addf %54, %29 : vector<8x96xf32>
    %56 = vector.extract_strided_slice %53 {offsets = [0, 0], sizes = [8, 64], strides = [1, 1]} : vector<8x96xf32> to vector<8x64xf32>
    %57 = vector.extract_strided_slice %55 {offsets = [0, 0], sizes = [8, 64], strides = [1, 1]} : vector<8x96xf32> to vector<8x64xf32>
    %58 = arith.addf %56, %57 : vector<8x64xf32>
    %59 = arith.negf %58 : vector<8x64xf32>
    %60 = math.exp %59 : vector<8x64xf32>
    %cst_22 = arith.constant 1.000000e+00 : f32
    %61 = vector.broadcast %cst_22 : f32 to vector<8x64xf32>
    %62 = arith.addf %61, %60 : vector<8x64xf32>
    %63 = arith.divf %61, %62 : vector<8x64xf32>
    %64 = vector.extract_strided_slice %63 {offsets = [0, 0], sizes = [8, 32], strides = [1, 1]} : vector<8x64xf32> to vector<8x32xf32>
    %65 = vector.extract_strided_slice %63 {offsets = [0, 32], sizes = [8, 32], strides = [1, 1]} : vector<8x64xf32> to vector<8x32xf32>
    %66 = vector.extract_strided_slice %53 {offsets = [0, 64], sizes = [8, 32], strides = [1, 1]} : vector<8x96xf32> to vector<8x32xf32>
    %67 = vector.extract_strided_slice %55 {offsets = [0, 64], sizes = [8, 32], strides = [1, 1]} : vector<8x96xf32> to vector<8x32xf32>
    %68 = arith.mulf %64, %67 : vector<8x32xf32>
    %69 = arith.addf %66, %68 : vector<8x32xf32>
    %70 = math.tanh %69 : vector<8x32xf32>
    %cst_23 = arith.constant 1.000000e+00 : f32
    %71 = vector.broadcast %cst_23 : f32 to vector<8x32xf32>
    %72 = arith.subf %71, %65 : vector<8x32xf32>
    %73 = arith.mulf %72, %70 : vector<8x32xf32>
    %74 = arith.mulf %65, %52 : vector<8x32xf32>
    %75 = arith.addf %73, %74 : vector<8x32xf32>
    %76 = vector.extract_strided_slice %24 {offsets = [16, 0], sizes = [8, 96], strides = [1, 1]} : vector<56x96xf32> to vector<8x96xf32>
    %cst_24 = arith.constant dense<0.000000e+00> : vector<8x96xf32>
    %77 = tpu.matmul %75, %13, %cst_24 {dimension_numbers = #tpu.dot_dimension_numbers<[1], [0], [0], [1], [0, 0, 1, 1], [], []>} : vector<8x32xf32>, vector<32x96xf32>, vector<8x96xf32> -> vector<8x96xf32>
    %78 = arith.addf %77, %29 : vector<8x96xf32>
    %79 = vector.extract_strided_slice %76 {offsets = [0, 0], sizes = [8, 64], strides = [1, 1]} : vector<8x96xf32> to vector<8x64xf32>
    %80 = vector.extract_strided_slice %78 {offsets = [0, 0], sizes = [8, 64], strides = [1, 1]} : vector<8x96xf32> to vector<8x64xf32>
    %81 = arith.addf %79, %80 : vector<8x64xf32>
    %82 = arith.negf %81 : vector<8x64xf32>
    %83 = math.exp %82 : vector<8x64xf32>
    %cst_25 = arith.constant 1.000000e+00 : f32
    %84 = vector.broadcast %cst_25 : f32 to vector<8x64xf32>
    %85 = arith.addf %84, %83 : vector<8x64xf32>
    %86 = arith.divf %84, %85 : vector<8x64xf32>
    %87 = vector.extract_strided_slice %86 {offsets = [0, 0], sizes = [8, 32], strides = [1, 1]} : vector<8x64xf32> to vector<8x32xf32>
    %88 = vector.extract_strided_slice %86 {offsets = [0, 32], sizes = [8, 32], strides = [1, 1]} : vector<8x64xf32> to vector<8x32xf32>
    %89 = vector.extract_strided_slice %76 {offsets = [0, 64], sizes = [8, 32], strides = [1, 1]} : vector<8x96xf32> to vector<8x32xf32>
    %90 = vector.extract_strided_slice %78 {offsets = [0, 64], sizes = [8, 32], strides = [1, 1]} : vector<8x96xf32> to vector<8x32xf32>
    %91 = arith.mulf %87, %90 : vector<8x32xf32>
    %92 = arith.addf %89, %91 : vector<8x32xf32>
    %93 = math.tanh %92 : vector<8x32xf32>
    %cst_26 = arith.constant 1.000000e+00 : f32
    %94 = vector.broadcast %cst_26 : f32 to vector<8x32xf32>
    %95 = arith.subf %94, %88 : vector<8x32xf32>
    %96 = arith.mulf %95, %93 : vector<8x32xf32>
    %97 = arith.mulf %88, %75 : vector<8x32xf32>
    %98 = arith.addf %96, %97 : vector<8x32xf32>
    %99 = vector.extract_strided_slice %24 {offsets = [24, 0], sizes = [8, 96], strides = [1, 1]} : vector<56x96xf32> to vector<8x96xf32>
    %cst_27 = arith.constant dense<0.000000e+00> : vector<8x96xf32>
    %100 = tpu.matmul %98, %13, %cst_27 {dimension_numbers = #tpu.dot_dimension_numbers<[1], [0], [0], [1], [0, 0, 1, 1], [], []>} : vector<8x32xf32>, vector<32x96xf32>, vector<8x96xf32> -> vector<8x96xf32>
    %101 = arith.addf %100, %29 : vector<8x96xf32>
    %102 = vector.extract_strided_slice %99 {offsets = [0, 0], sizes = [8, 64], strides = [1, 1]} : vector<8x96xf32> to vector<8x64xf32>
    %103 = vector.extract_strided_slice %101 {offsets = [0, 0], sizes = [8, 64], strides = [1, 1]} : vector<8x96xf32> to vector<8x64xf32>
    %104 = arith.addf %102, %103 : vector<8x64xf32>
    %105 = arith.negf %104 : vector<8x64xf32>
    %106 = math.exp %105 : vector<8x64xf32>
    %cst_28 = arith.constant 1.000000e+00 : f32
    %107 = vector.broadcast %cst_28 : f32 to vector<8x64xf32>
    %108 = arith.addf %107, %106 : vector<8x64xf32>
    %109 = arith.divf %107, %108 : vector<8x64xf32>
    %110 = vector.extract_strided_slice %109 {offsets = [0, 0], sizes = [8, 32], strides = [1, 1]} : vector<8x64xf32> to vector<8x32xf32>
    %111 = vector.extract_strided_slice %109 {offsets = [0, 32], sizes = [8, 32], strides = [1, 1]} : vector<8x64xf32> to vector<8x32xf32>
    %112 = vector.extract_strided_slice %99 {offsets = [0, 64], sizes = [8, 32], strides = [1, 1]} : vector<8x96xf32> to vector<8x32xf32>
    %113 = vector.extract_strided_slice %101 {offsets = [0, 64], sizes = [8, 32], strides = [1, 1]} : vector<8x96xf32> to vector<8x32xf32>
    %114 = arith.mulf %110, %113 : vector<8x32xf32>
    %115 = arith.addf %112, %114 : vector<8x32xf32>
    %116 = math.tanh %115 : vector<8x32xf32>
    %cst_29 = arith.constant 1.000000e+00 : f32
    %117 = vector.broadcast %cst_29 : f32 to vector<8x32xf32>
    %118 = arith.subf %117, %111 : vector<8x32xf32>
    %119 = arith.mulf %118, %116 : vector<8x32xf32>
    %120 = arith.mulf %111, %98 : vector<8x32xf32>
    %121 = arith.addf %119, %120 : vector<8x32xf32>
    %122 = vector.extract_strided_slice %24 {offsets = [32, 0], sizes = [8, 96], strides = [1, 1]} : vector<56x96xf32> to vector<8x96xf32>
    %cst_30 = arith.constant dense<0.000000e+00> : vector<8x96xf32>
    %123 = tpu.matmul %121, %13, %cst_30 {dimension_numbers = #tpu.dot_dimension_numbers<[1], [0], [0], [1], [0, 0, 1, 1], [], []>} : vector<8x32xf32>, vector<32x96xf32>, vector<8x96xf32> -> vector<8x96xf32>
    %124 = arith.addf %123, %29 : vector<8x96xf32>
    %125 = vector.extract_strided_slice %122 {offsets = [0, 0], sizes = [8, 64], strides = [1, 1]} : vector<8x96xf32> to vector<8x64xf32>
    %126 = vector.extract_strided_slice %124 {offsets = [0, 0], sizes = [8, 64], strides = [1, 1]} : vector<8x96xf32> to vector<8x64xf32>
    %127 = arith.addf %125, %126 : vector<8x64xf32>
    %128 = arith.negf %127 : vector<8x64xf32>
    %129 = math.exp %128 : vector<8x64xf32>
    %cst_31 = arith.constant 1.000000e+00 : f32
    %130 = vector.broadcast %cst_31 : f32 to vector<8x64xf32>
    %131 = arith.addf %130, %129 : vector<8x64xf32>
    %132 = arith.divf %130, %131 : vector<8x64xf32>
    %133 = vector.extract_strided_slice %132 {offsets = [0, 0], sizes = [8, 32], strides = [1, 1]} : vector<8x64xf32> to vector<8x32xf32>
    %134 = vector.extract_strided_slice %132 {offsets = [0, 32], sizes = [8, 32], strides = [1, 1]} : vector<8x64xf32> to vector<8x32xf32>
    %135 = vector.extract_strided_slice %122 {offsets = [0, 64], sizes = [8, 32], strides = [1, 1]} : vector<8x96xf32> to vector<8x32xf32>
    %136 = vector.extract_strided_slice %124 {offsets = [0, 64], sizes = [8, 32], strides = [1, 1]} : vector<8x96xf32> to vector<8x32xf32>
    %137 = arith.mulf %133, %136 : vector<8x32xf32>
    %138 = arith.addf %135, %137 : vector<8x32xf32>
    %139 = math.tanh %138 : vector<8x32xf32>
    %cst_32 = arith.constant 1.000000e+00 : f32
    %140 = vector.broadcast %cst_32 : f32 to vector<8x32xf32>
    %141 = arith.subf %140, %134 : vector<8x32xf32>
    %142 = arith.mulf %141, %139 : vector<8x32xf32>
    %143 = arith.mulf %134, %121 : vector<8x32xf32>
    %144 = arith.addf %142, %143 : vector<8x32xf32>
    %145 = vector.extract_strided_slice %24 {offsets = [40, 0], sizes = [8, 96], strides = [1, 1]} : vector<56x96xf32> to vector<8x96xf32>
    %cst_33 = arith.constant dense<0.000000e+00> : vector<8x96xf32>
    %146 = tpu.matmul %144, %13, %cst_33 {dimension_numbers = #tpu.dot_dimension_numbers<[1], [0], [0], [1], [0, 0, 1, 1], [], []>} : vector<8x32xf32>, vector<32x96xf32>, vector<8x96xf32> -> vector<8x96xf32>
    %147 = arith.addf %146, %29 : vector<8x96xf32>
    %148 = vector.extract_strided_slice %145 {offsets = [0, 0], sizes = [8, 64], strides = [1, 1]} : vector<8x96xf32> to vector<8x64xf32>
    %149 = vector.extract_strided_slice %147 {offsets = [0, 0], sizes = [8, 64], strides = [1, 1]} : vector<8x96xf32> to vector<8x64xf32>
    %150 = arith.addf %148, %149 : vector<8x64xf32>
    %151 = arith.negf %150 : vector<8x64xf32>
    %152 = math.exp %151 : vector<8x64xf32>
    %cst_34 = arith.constant 1.000000e+00 : f32
    %153 = vector.broadcast %cst_34 : f32 to vector<8x64xf32>
    %154 = arith.addf %153, %152 : vector<8x64xf32>
    %155 = arith.divf %153, %154 : vector<8x64xf32>
    %156 = vector.extract_strided_slice %155 {offsets = [0, 0], sizes = [8, 32], strides = [1, 1]} : vector<8x64xf32> to vector<8x32xf32>
    %157 = vector.extract_strided_slice %155 {offsets = [0, 32], sizes = [8, 32], strides = [1, 1]} : vector<8x64xf32> to vector<8x32xf32>
    %158 = vector.extract_strided_slice %145 {offsets = [0, 64], sizes = [8, 32], strides = [1, 1]} : vector<8x96xf32> to vector<8x32xf32>
    %159 = vector.extract_strided_slice %147 {offsets = [0, 64], sizes = [8, 32], strides = [1, 1]} : vector<8x96xf32> to vector<8x32xf32>
    %160 = arith.mulf %156, %159 : vector<8x32xf32>
    %161 = arith.addf %158, %160 : vector<8x32xf32>
    %162 = math.tanh %161 : vector<8x32xf32>
    %cst_35 = arith.constant 1.000000e+00 : f32
    %163 = vector.broadcast %cst_35 : f32 to vector<8x32xf32>
    %164 = arith.subf %163, %157 : vector<8x32xf32>
    %165 = arith.mulf %164, %162 : vector<8x32xf32>
    %166 = arith.mulf %157, %144 : vector<8x32xf32>
    %167 = arith.addf %165, %166 : vector<8x32xf32>
    %168 = vector.extract_strided_slice %24 {offsets = [48, 0], sizes = [8, 96], strides = [1, 1]} : vector<56x96xf32> to vector<8x96xf32>
    %cst_36 = arith.constant dense<0.000000e+00> : vector<8x96xf32>
    %169 = tpu.matmul %167, %13, %cst_36 {dimension_numbers = #tpu.dot_dimension_numbers<[1], [0], [0], [1], [0, 0, 1, 1], [], []>} : vector<8x32xf32>, vector<32x96xf32>, vector<8x96xf32> -> vector<8x96xf32>
    %170 = arith.addf %169, %29 : vector<8x96xf32>
    %171 = vector.extract_strided_slice %168 {offsets = [0, 0], sizes = [8, 64], strides = [1, 1]} : vector<8x96xf32> to vector<8x64xf32>
    %172 = vector.extract_strided_slice %170 {offsets = [0, 0], sizes = [8, 64], strides = [1, 1]} : vector<8x96xf32> to vector<8x64xf32>
    %173 = arith.addf %171, %172 : vector<8x64xf32>
    %174 = arith.negf %173 : vector<8x64xf32>
    %175 = math.exp %174 : vector<8x64xf32>
    %cst_37 = arith.constant 1.000000e+00 : f32
    %176 = vector.broadcast %cst_37 : f32 to vector<8x64xf32>
    %177 = arith.addf %176, %175 : vector<8x64xf32>
    %178 = arith.divf %176, %177 : vector<8x64xf32>
    %179 = vector.extract_strided_slice %178 {offsets = [0, 0], sizes = [8, 32], strides = [1, 1]} : vector<8x64xf32> to vector<8x32xf32>
    %180 = vector.extract_strided_slice %178 {offsets = [0, 32], sizes = [8, 32], strides = [1, 1]} : vector<8x64xf32> to vector<8x32xf32>
    %181 = vector.extract_strided_slice %168 {offsets = [0, 64], sizes = [8, 32], strides = [1, 1]} : vector<8x96xf32> to vector<8x32xf32>
    %182 = vector.extract_strided_slice %170 {offsets = [0, 64], sizes = [8, 32], strides = [1, 1]} : vector<8x96xf32> to vector<8x32xf32>
    %183 = arith.mulf %179, %182 : vector<8x32xf32>
    %184 = arith.addf %181, %183 : vector<8x32xf32>
    %185 = math.tanh %184 : vector<8x32xf32>
    %cst_38 = arith.constant 1.000000e+00 : f32
    %186 = vector.broadcast %cst_38 : f32 to vector<8x32xf32>
    %187 = arith.subf %186, %180 : vector<8x32xf32>
    %188 = arith.mulf %187, %185 : vector<8x32xf32>
    %189 = arith.mulf %180, %167 : vector<8x32xf32>
    %190 = arith.addf %188, %189 : vector<8x32xf32>
    %191 = tpu.concatenate %52, %75, %98, %121, %144, %167, %190 in 0 : vector<8x32xf32>, vector<8x32xf32>, vector<8x32xf32>, vector<8x32xf32>, vector<8x32xf32>, vector<8x32xf32>, vector<8x32xf32> -> vector<56x32xf32>
    %c1 = arith.constant 1 : index
    %c0_39 = arith.constant 0 : index
    %c0_40 = arith.constant 0 : index
    %192 = vector.load %arg3[%c1, %c0_39, %c0_40] : memref<2x32x256xf32, #tpu.memory_space<vmem>>, vector<1x32x256xf32>
    %193 = vector.shape_cast %192 : vector<1x32x256xf32> to vector<32x256xf32>
    %194 = vector.extract_strided_slice %193 {offsets = [0, 0], sizes = [32, 96], strides = [1, 1]} : vector<32x256xf32> to vector<32x96xf32>
    %195 = vector.extract_strided_slice %193 {offsets = [0, 128], sizes = [32, 96], strides = [1, 1]} : vector<32x256xf32> to vector<32x96xf32>
    %c1_41 = arith.constant 1 : index
    %c0_42 = arith.constant 0 : index
    %c0_43 = arith.constant 0 : index
    %196 = vector.load %arg5[%c1_41, %c0_42, %c0_43] : memref<2x2x96xf32, #tpu.memory_space<vmem>>, vector<1x2x96xf32>
    %197 = vector.shape_cast %196 : vector<1x2x96xf32> to vector<2x96xf32>
    %198 = vector.extract_strided_slice %197 {offsets = [0, 0], sizes = [1, 96], strides = [1, 1]} : vector<2x96xf32> to vector<1x96xf32>
    %199 = vector.extract_strided_slice %197 {offsets = [1, 0], sizes = [1, 96], strides = [1, 1]} : vector<2x96xf32> to vector<1x96xf32>
    %c1_44 = arith.constant 1 : index
    %c0_45 = arith.constant 0 : index
    %c0_46 = arith.constant 0 : index
    %200 = vector.load %arg4[%c1_44, %c0_45, %c0_46] : memref<2x9x32xf32, #tpu.memory_space<vmem>>, vector<1x9x32xf32>
    %201 = vector.shape_cast %200 : vector<1x9x32xf32> to vector<9x32xf32>
    %202 = vector.extract_strided_slice %201 {offsets = [0, 0], sizes = [8, 32], strides = [1, 1]} : vector<9x32xf32> to vector<8x32xf32>
    %203 = vector.extract_strided_slice %201 {offsets = [8, 0], sizes = [1, 32], strides = [1, 1]} : vector<9x32xf32> to vector<1x32xf32>
    %cst_47 = arith.constant dense<0.000000e+00> : vector<56x96xf32>
    %204 = tpu.matmul %191, %194, %cst_47 {dimension_numbers = #tpu.dot_dimension_numbers<[1], [0], [0], [1], [0, 0, 1, 1], [], []>} : vector<56x32xf32>, vector<32x96xf32>, vector<56x96xf32> -> vector<56x96xf32>
    %205 = vector.broadcast %198 : vector<1x96xf32> to vector<56x96xf32>
    %206 = arith.addf %204, %205 : vector<56x96xf32>
    %cst_48 = arith.constant dense<0.000000e+00> : vector<8x32xf32>
    %207 = tpu.matmul %9, %202, %cst_48 {dimension_numbers = #tpu.dot_dimension_numbers<[1], [0], [0], [1], [0, 0, 1, 1], [], []>} : vector<8x8xf32>, vector<8x32xf32>, vector<8x32xf32> -> vector<8x32xf32>
    %208 = vector.broadcast %203 : vector<1x32xf32> to vector<8x32xf32>
    %209 = arith.addf %207, %208 : vector<8x32xf32>
    %210 = vector.shape_cast %199 : vector<1x96xf32> to vector<1x96xf32>
    %211 = vector.broadcast %210 : vector<1x96xf32> to vector<8x96xf32>
    %212 = vector.extract_strided_slice %206 {offsets = [0, 0], sizes = [8, 96], strides = [1, 1]} : vector<56x96xf32> to vector<8x96xf32>
    %cst_49 = arith.constant dense<0.000000e+00> : vector<8x96xf32>
    %213 = tpu.matmul %209, %195, %cst_49 {dimension_numbers = #tpu.dot_dimension_numbers<[1], [0], [0], [1], [0, 0, 1, 1], [], []>} : vector<8x32xf32>, vector<32x96xf32>, vector<8x96xf32> -> vector<8x96xf32>
    %214 = arith.addf %213, %211 : vector<8x96xf32>
    %215 = vector.extract_strided_slice %212 {offsets = [0, 0], sizes = [8, 64], strides = [1, 1]} : vector<8x96xf32> to vector<8x64xf32>
    %216 = vector.extract_strided_slice %214 {offsets = [0, 0], sizes = [8, 64], strides = [1, 1]} : vector<8x96xf32> to vector<8x64xf32>
    %217 = arith.addf %215, %216 : vector<8x64xf32>
    %218 = arith.negf %217 : vector<8x64xf32>
    %219 = math.exp %218 : vector<8x64xf32>
    %cst_50 = arith.constant 1.000000e+00 : f32
    %220 = vector.broadcast %cst_50 : f32 to vector<8x64xf32>
    %221 = arith.addf %220, %219 : vector<8x64xf32>
    %222 = arith.divf %220, %221 : vector<8x64xf32>
    %223 = vector.extract_strided_slice %222 {offsets = [0, 0], sizes = [8, 32], strides = [1, 1]} : vector<8x64xf32> to vector<8x32xf32>
    %224 = vector.extract_strided_slice %222 {offsets = [0, 32], sizes = [8, 32], strides = [1, 1]} : vector<8x64xf32> to vector<8x32xf32>
    %225 = vector.extract_strided_slice %212 {offsets = [0, 64], sizes = [8, 32], strides = [1, 1]} : vector<8x96xf32> to vector<8x32xf32>
    %226 = vector.extract_strided_slice %214 {offsets = [0, 64], sizes = [8, 32], strides = [1, 1]} : vector<8x96xf32> to vector<8x32xf32>
    %227 = arith.mulf %223, %226 : vector<8x32xf32>
    %228 = arith.addf %225, %227 : vector<8x32xf32>
    %229 = math.tanh %228 : vector<8x32xf32>
    %cst_51 = arith.constant 1.000000e+00 : f32
    %230 = vector.broadcast %cst_51 : f32 to vector<8x32xf32>
    %231 = arith.subf %230, %224 : vector<8x32xf32>
    %232 = arith.mulf %231, %229 : vector<8x32xf32>
    %233 = arith.mulf %224, %209 : vector<8x32xf32>
    %234 = arith.addf %232, %233 : vector<8x32xf32>
    %235 = vector.extract_strided_slice %206 {offsets = [8, 0], sizes = [8, 96], strides = [1, 1]} : vector<56x96xf32> to vector<8x96xf32>
    %cst_52 = arith.constant dense<0.000000e+00> : vector<8x96xf32>
    %236 = tpu.matmul %234, %195, %cst_52 {dimension_numbers = #tpu.dot_dimension_numbers<[1], [0], [0], [1], [0, 0, 1, 1], [], []>} : vector<8x32xf32>, vector<32x96xf32>, vector<8x96xf32> -> vector<8x96xf32>
    %237 = arith.addf %236, %211 : vector<8x96xf32>
    %238 = vector.extract_strided_slice %235 {offsets = [0, 0], sizes = [8, 64], strides = [1, 1]} : vector<8x96xf32> to vector<8x64xf32>
    %239 = vector.extract_strided_slice %237 {offsets = [0, 0], sizes = [8, 64], strides = [1, 1]} : vector<8x96xf32> to vector<8x64xf32>
    %240 = arith.addf %238, %239 : vector<8x64xf32>
    %241 = arith.negf %240 : vector<8x64xf32>
    %242 = math.exp %241 : vector<8x64xf32>
    %cst_53 = arith.constant 1.000000e+00 : f32
    %243 = vector.broadcast %cst_53 : f32 to vector<8x64xf32>
    %244 = arith.addf %243, %242 : vector<8x64xf32>
    %245 = arith.divf %243, %244 : vector<8x64xf32>
    %246 = vector.extract_strided_slice %245 {offsets = [0, 0], sizes = [8, 32], strides = [1, 1]} : vector<8x64xf32> to vector<8x32xf32>
    %247 = vector.extract_strided_slice %245 {offsets = [0, 32], sizes = [8, 32], strides = [1, 1]} : vector<8x64xf32> to vector<8x32xf32>
    %248 = vector.extract_strided_slice %235 {offsets = [0, 64], sizes = [8, 32], strides = [1, 1]} : vector<8x96xf32> to vector<8x32xf32>
    %249 = vector.extract_strided_slice %237 {offsets = [0, 64], sizes = [8, 32], strides = [1, 1]} : vector<8x96xf32> to vector<8x32xf32>
    %250 = arith.mulf %246, %249 : vector<8x32xf32>
    %251 = arith.addf %248, %250 : vector<8x32xf32>
    %252 = math.tanh %251 : vector<8x32xf32>
    %cst_54 = arith.constant 1.000000e+00 : f32
    %253 = vector.broadcast %cst_54 : f32 to vector<8x32xf32>
    %254 = arith.subf %253, %247 : vector<8x32xf32>
    %255 = arith.mulf %254, %252 : vector<8x32xf32>
    %256 = arith.mulf %247, %234 : vector<8x32xf32>
    %257 = arith.addf %255, %256 : vector<8x32xf32>
    %258 = vector.extract_strided_slice %206 {offsets = [16, 0], sizes = [8, 96], strides = [1, 1]} : vector<56x96xf32> to vector<8x96xf32>
    %cst_55 = arith.constant dense<0.000000e+00> : vector<8x96xf32>
    %259 = tpu.matmul %257, %195, %cst_55 {dimension_numbers = #tpu.dot_dimension_numbers<[1], [0], [0], [1], [0, 0, 1, 1], [], []>} : vector<8x32xf32>, vector<32x96xf32>, vector<8x96xf32> -> vector<8x96xf32>
    %260 = arith.addf %259, %211 : vector<8x96xf32>
    %261 = vector.extract_strided_slice %258 {offsets = [0, 0], sizes = [8, 64], strides = [1, 1]} : vector<8x96xf32> to vector<8x64xf32>
    %262 = vector.extract_strided_slice %260 {offsets = [0, 0], sizes = [8, 64], strides = [1, 1]} : vector<8x96xf32> to vector<8x64xf32>
    %263 = arith.addf %261, %262 : vector<8x64xf32>
    %264 = arith.negf %263 : vector<8x64xf32>
    %265 = math.exp %264 : vector<8x64xf32>
    %cst_56 = arith.constant 1.000000e+00 : f32
    %266 = vector.broadcast %cst_56 : f32 to vector<8x64xf32>
    %267 = arith.addf %266, %265 : vector<8x64xf32>
    %268 = arith.divf %266, %267 : vector<8x64xf32>
    %269 = vector.extract_strided_slice %268 {offsets = [0, 0], sizes = [8, 32], strides = [1, 1]} : vector<8x64xf32> to vector<8x32xf32>
    %270 = vector.extract_strided_slice %268 {offsets = [0, 32], sizes = [8, 32], strides = [1, 1]} : vector<8x64xf32> to vector<8x32xf32>
    %271 = vector.extract_strided_slice %258 {offsets = [0, 64], sizes = [8, 32], strides = [1, 1]} : vector<8x96xf32> to vector<8x32xf32>
    %272 = vector.extract_strided_slice %260 {offsets = [0, 64], sizes = [8, 32], strides = [1, 1]} : vector<8x96xf32> to vector<8x32xf32>
    %273 = arith.mulf %269, %272 : vector<8x32xf32>
    %274 = arith.addf %271, %273 : vector<8x32xf32>
    %275 = math.tanh %274 : vector<8x32xf32>
    %cst_57 = arith.constant 1.000000e+00 : f32
    %276 = vector.broadcast %cst_57 : f32 to vector<8x32xf32>
    %277 = arith.subf %276, %270 : vector<8x32xf32>
    %278 = arith.mulf %277, %275 : vector<8x32xf32>
    %279 = arith.mulf %270, %257 : vector<8x32xf32>
    %280 = arith.addf %278, %279 : vector<8x32xf32>
    %281 = vector.extract_strided_slice %206 {offsets = [24, 0], sizes = [8, 96], strides = [1, 1]} : vector<56x96xf32> to vector<8x96xf32>
    %cst_58 = arith.constant dense<0.000000e+00> : vector<8x96xf32>
    %282 = tpu.matmul %280, %195, %cst_58 {dimension_numbers = #tpu.dot_dimension_numbers<[1], [0], [0], [1], [0, 0, 1, 1], [], []>} : vector<8x32xf32>, vector<32x96xf32>, vector<8x96xf32> -> vector<8x96xf32>
    %283 = arith.addf %282, %211 : vector<8x96xf32>
    %284 = vector.extract_strided_slice %281 {offsets = [0, 0], sizes = [8, 64], strides = [1, 1]} : vector<8x96xf32> to vector<8x64xf32>
    %285 = vector.extract_strided_slice %283 {offsets = [0, 0], sizes = [8, 64], strides = [1, 1]} : vector<8x96xf32> to vector<8x64xf32>
    %286 = arith.addf %284, %285 : vector<8x64xf32>
    %287 = arith.negf %286 : vector<8x64xf32>
    %288 = math.exp %287 : vector<8x64xf32>
    %cst_59 = arith.constant 1.000000e+00 : f32
    %289 = vector.broadcast %cst_59 : f32 to vector<8x64xf32>
    %290 = arith.addf %289, %288 : vector<8x64xf32>
    %291 = arith.divf %289, %290 : vector<8x64xf32>
    %292 = vector.extract_strided_slice %291 {offsets = [0, 0], sizes = [8, 32], strides = [1, 1]} : vector<8x64xf32> to vector<8x32xf32>
    %293 = vector.extract_strided_slice %291 {offsets = [0, 32], sizes = [8, 32], strides = [1, 1]} : vector<8x64xf32> to vector<8x32xf32>
    %294 = vector.extract_strided_slice %281 {offsets = [0, 64], sizes = [8, 32], strides = [1, 1]} : vector<8x96xf32> to vector<8x32xf32>
    %295 = vector.extract_strided_slice %283 {offsets = [0, 64], sizes = [8, 32], strides = [1, 1]} : vector<8x96xf32> to vector<8x32xf32>
    %296 = arith.mulf %292, %295 : vector<8x32xf32>
    %297 = arith.addf %294, %296 : vector<8x32xf32>
    %298 = math.tanh %297 : vector<8x32xf32>
    %cst_60 = arith.constant 1.000000e+00 : f32
    %299 = vector.broadcast %cst_60 : f32 to vector<8x32xf32>
    %300 = arith.subf %299, %293 : vector<8x32xf32>
    %301 = arith.mulf %300, %298 : vector<8x32xf32>
    %302 = arith.mulf %293, %280 : vector<8x32xf32>
    %303 = arith.addf %301, %302 : vector<8x32xf32>
    %304 = vector.extract_strided_slice %206 {offsets = [32, 0], sizes = [8, 96], strides = [1, 1]} : vector<56x96xf32> to vector<8x96xf32>
    %cst_61 = arith.constant dense<0.000000e+00> : vector<8x96xf32>
    %305 = tpu.matmul %303, %195, %cst_61 {dimension_numbers = #tpu.dot_dimension_numbers<[1], [0], [0], [1], [0, 0, 1, 1], [], []>} : vector<8x32xf32>, vector<32x96xf32>, vector<8x96xf32> -> vector<8x96xf32>
    %306 = arith.addf %305, %211 : vector<8x96xf32>
    %307 = vector.extract_strided_slice %304 {offsets = [0, 0], sizes = [8, 64], strides = [1, 1]} : vector<8x96xf32> to vector<8x64xf32>
    %308 = vector.extract_strided_slice %306 {offsets = [0, 0], sizes = [8, 64], strides = [1, 1]} : vector<8x96xf32> to vector<8x64xf32>
    %309 = arith.addf %307, %308 : vector<8x64xf32>
    %310 = arith.negf %309 : vector<8x64xf32>
    %311 = math.exp %310 : vector<8x64xf32>
    %cst_62 = arith.constant 1.000000e+00 : f32
    %312 = vector.broadcast %cst_62 : f32 to vector<8x64xf32>
    %313 = arith.addf %312, %311 : vector<8x64xf32>
    %314 = arith.divf %312, %313 : vector<8x64xf32>
    %315 = vector.extract_strided_slice %314 {offsets = [0, 0], sizes = [8, 32], strides = [1, 1]} : vector<8x64xf32> to vector<8x32xf32>
    %316 = vector.extract_strided_slice %314 {offsets = [0, 32], sizes = [8, 32], strides = [1, 1]} : vector<8x64xf32> to vector<8x32xf32>
    %317 = vector.extract_strided_slice %304 {offsets = [0, 64], sizes = [8, 32], strides = [1, 1]} : vector<8x96xf32> to vector<8x32xf32>
    %318 = vector.extract_strided_slice %306 {offsets = [0, 64], sizes = [8, 32], strides = [1, 1]} : vector<8x96xf32> to vector<8x32xf32>
    %319 = arith.mulf %315, %318 : vector<8x32xf32>
    %320 = arith.addf %317, %319 : vector<8x32xf32>
    %321 = math.tanh %320 : vector<8x32xf32>
    %cst_63 = arith.constant 1.000000e+00 : f32
    %322 = vector.broadcast %cst_63 : f32 to vector<8x32xf32>
    %323 = arith.subf %322, %316 : vector<8x32xf32>
    %324 = arith.mulf %323, %321 : vector<8x32xf32>
    %325 = arith.mulf %316, %303 : vector<8x32xf32>
    %326 = arith.addf %324, %325 : vector<8x32xf32>
    %327 = vector.extract_strided_slice %206 {offsets = [40, 0], sizes = [8, 96], strides = [1, 1]} : vector<56x96xf32> to vector<8x96xf32>
    %cst_64 = arith.constant dense<0.000000e+00> : vector<8x96xf32>
    %328 = tpu.matmul %326, %195, %cst_64 {dimension_numbers = #tpu.dot_dimension_numbers<[1], [0], [0], [1], [0, 0, 1, 1], [], []>} : vector<8x32xf32>, vector<32x96xf32>, vector<8x96xf32> -> vector<8x96xf32>
    %329 = arith.addf %328, %211 : vector<8x96xf32>
    %330 = vector.extract_strided_slice %327 {offsets = [0, 0], sizes = [8, 64], strides = [1, 1]} : vector<8x96xf32> to vector<8x64xf32>
    %331 = vector.extract_strided_slice %329 {offsets = [0, 0], sizes = [8, 64], strides = [1, 1]} : vector<8x96xf32> to vector<8x64xf32>
    %332 = arith.addf %330, %331 : vector<8x64xf32>
    %333 = arith.negf %332 : vector<8x64xf32>
    %334 = math.exp %333 : vector<8x64xf32>
    %cst_65 = arith.constant 1.000000e+00 : f32
    %335 = vector.broadcast %cst_65 : f32 to vector<8x64xf32>
    %336 = arith.addf %335, %334 : vector<8x64xf32>
    %337 = arith.divf %335, %336 : vector<8x64xf32>
    %338 = vector.extract_strided_slice %337 {offsets = [0, 0], sizes = [8, 32], strides = [1, 1]} : vector<8x64xf32> to vector<8x32xf32>
    %339 = vector.extract_strided_slice %337 {offsets = [0, 32], sizes = [8, 32], strides = [1, 1]} : vector<8x64xf32> to vector<8x32xf32>
    %340 = vector.extract_strided_slice %327 {offsets = [0, 64], sizes = [8, 32], strides = [1, 1]} : vector<8x96xf32> to vector<8x32xf32>
    %341 = vector.extract_strided_slice %329 {offsets = [0, 64], sizes = [8, 32], strides = [1, 1]} : vector<8x96xf32> to vector<8x32xf32>
    %342 = arith.mulf %338, %341 : vector<8x32xf32>
    %343 = arith.addf %340, %342 : vector<8x32xf32>
    %344 = math.tanh %343 : vector<8x32xf32>
    %cst_66 = arith.constant 1.000000e+00 : f32
    %345 = vector.broadcast %cst_66 : f32 to vector<8x32xf32>
    %346 = arith.subf %345, %339 : vector<8x32xf32>
    %347 = arith.mulf %346, %344 : vector<8x32xf32>
    %348 = arith.mulf %339, %326 : vector<8x32xf32>
    %349 = arith.addf %347, %348 : vector<8x32xf32>
    %350 = vector.extract_strided_slice %206 {offsets = [48, 0], sizes = [8, 96], strides = [1, 1]} : vector<56x96xf32> to vector<8x96xf32>
    %cst_67 = arith.constant dense<0.000000e+00> : vector<8x96xf32>
    %351 = tpu.matmul %349, %195, %cst_67 {dimension_numbers = #tpu.dot_dimension_numbers<[1], [0], [0], [1], [0, 0, 1, 1], [], []>} : vector<8x32xf32>, vector<32x96xf32>, vector<8x96xf32> -> vector<8x96xf32>
    %352 = arith.addf %351, %211 : vector<8x96xf32>
    %353 = vector.extract_strided_slice %350 {offsets = [0, 0], sizes = [8, 64], strides = [1, 1]} : vector<8x96xf32> to vector<8x64xf32>
    %354 = vector.extract_strided_slice %352 {offsets = [0, 0], sizes = [8, 64], strides = [1, 1]} : vector<8x96xf32> to vector<8x64xf32>
    %355 = arith.addf %353, %354 : vector<8x64xf32>
    %356 = arith.negf %355 : vector<8x64xf32>
    %357 = math.exp %356 : vector<8x64xf32>
    %cst_68 = arith.constant 1.000000e+00 : f32
    %358 = vector.broadcast %cst_68 : f32 to vector<8x64xf32>
    %359 = arith.addf %358, %357 : vector<8x64xf32>
    %360 = arith.divf %358, %359 : vector<8x64xf32>
    %361 = vector.extract_strided_slice %360 {offsets = [0, 0], sizes = [8, 32], strides = [1, 1]} : vector<8x64xf32> to vector<8x32xf32>
    %362 = vector.extract_strided_slice %360 {offsets = [0, 32], sizes = [8, 32], strides = [1, 1]} : vector<8x64xf32> to vector<8x32xf32>
    %363 = vector.extract_strided_slice %350 {offsets = [0, 64], sizes = [8, 32], strides = [1, 1]} : vector<8x96xf32> to vector<8x32xf32>
    %364 = vector.extract_strided_slice %352 {offsets = [0, 64], sizes = [8, 32], strides = [1, 1]} : vector<8x96xf32> to vector<8x32xf32>
    %365 = arith.mulf %361, %364 : vector<8x32xf32>
    %366 = arith.addf %363, %365 : vector<8x32xf32>
    %367 = math.tanh %366 : vector<8x32xf32>
    %cst_69 = arith.constant 1.000000e+00 : f32
    %368 = vector.broadcast %cst_69 : f32 to vector<8x32xf32>
    %369 = arith.subf %368, %362 : vector<8x32xf32>
    %370 = arith.mulf %369, %367 : vector<8x32xf32>
    %371 = arith.mulf %362, %349 : vector<8x32xf32>
    %372 = arith.addf %370, %371 : vector<8x32xf32>
    %373 = tpu.concatenate %234, %257, %280, %303, %326, %349, %372 in 0 : vector<8x32xf32>, vector<8x32xf32>, vector<8x32xf32>, vector<8x32xf32>, vector<8x32xf32>, vector<8x32xf32>, vector<8x32xf32> -> vector<56x32xf32>
    %c0_70 = arith.constant 0 : index
    %c0_71 = arith.constant 0 : index
    %374 = vector.load %arg6[%c0_70, %c0_71] : memref<32x128xf32, #tpu.memory_space<vmem>>, vector<32x128xf32>
    %cst_72 = arith.constant dense<0.000000e+00> : vector<56x128xf32>
    %375 = tpu.matmul %373, %374, %cst_72 {dimension_numbers = #tpu.dot_dimension_numbers<[1], [0], [0], [1], [0, 0, 1, 1], [], []>} : vector<56x32xf32>, vector<32x128xf32>, vector<56x128xf32> -> vector<56x128xf32>
    %c0_73 = arith.constant 0 : index
    %c0_74 = arith.constant 0 : index
    %376 = vector.load %arg7[%c0_73, %c0_74] : memref<1x128xf32, #tpu.memory_space<vmem>>, vector<1x128xf32>
    %377 = vector.broadcast %376 : vector<1x128xf32> to vector<56x128xf32>
    %378 = arith.addf %375, %377 : vector<56x128xf32>
    %c0_75 = arith.constant 0 : index
    %c0_76 = arith.constant 0 : index
    %379 = vector.load %arg8[%c0_75, %c0_76] : memref<56x128xf32, #tpu.memory_space<vmem>>, vector<56x128xf32>
    tpu.vector_store %arg8[%c0_75, %c0_76], %378 {strides = array<i32>} : memref<56x128xf32, #tpu.memory_space<vmem>>, vector<56x128xf32>,
    return
  }
}

</mosaic_0001>

<llo_original>
// kernel: bigru_decoder_forward.1
$region0: #{bigru_decoder_forward.1}
  #allocation0 [shape = 'u32[]', space=smem, size = 0x4, offset = 0x4, fixed_abs, tag = 'smem constant byte address 0x4 - core index']
  #allocation1 [shape = 'u32[144,128]{1,0:T(1,128)}', space=vmem, size = 0x12000, scoped, tag = 'internal scratch']
  %s0 = inlined_call_operand.vmem [shape: s32[56,1], index: 0, kind: input, shape index: {}]
  %s1 = inlined_call_operand.vmem [shape: f32[8,8], index: 1, kind: input, shape index: {}]
  %s2 = inlined_call_operand.vmem [shape: f32[32,32], index: 2, kind: input, shape index: {}]
  %s3 = inlined_call_operand.vmem [shape: f32[2,32,256], index: 3, kind: input, shape index: {}]
  %s4 = inlined_call_operand.vmem [shape: f32[2,9,32], index: 4, kind: input, shape index: {}]
  %s5 = inlined_call_operand.vmem [shape: f32[2,2,96], index: 5, kind: input, shape index: {}]
  %s6 = inlined_call_operand.hbm [shape: f32[32,128], index: 6, kind: input, shape index: {}]
  %s7 = inlined_call_operand.vmem [shape: f32[1,128], index: 7, kind: input, shape index: {}]
  %s8 = inlined_call_operand.vmem [shape: f32[56,128], index: 8, kind: output, shape index: {}]
  %s9 = sld [smem:[#allocation0]]
  $region46: #{bigru_decoder_forward.1} parent=0
    _
  %s11 = ssub.s32 1, %s9
  %s12 = scalar_select 0, %s11, %s9
  $region1: #{bigru_decoder_forward.1} parent=0
    #allocation2 [shape = 'u8[16384]{0}', space=vmem, size = 0x4000, scoped, tag = 'input window, operand 6, single buffered']
    #allocation3 [shape = 's32[1]{0}', space=sflag, size = 0x4, scoped, tag = 'scoped memory for bigru_decoder_forward.1']
    %13 = vsyncpa [#allocation3], 0
    // Predicated region
    $region2: #{bigru_decoder_forward.1} parent=1 // pred_check
      _
    $region3: #{bigru_decoder_forward.1} parent=1 // pred_check_branch
      %15 = sbr.rel (0) target = $region5
    $region4: #{bigru_decoder_forward.1} parent=1 // pred_region
      _
    $region5: #{bigru_decoder_forward.1} parent=1 // pred_fallthru
      _
    // Predicated region
    $region6: #{bigru_decoder_forward.1} parent=1 // pred_check
      _
    $region7: #{bigru_decoder_forward.1} parent=1 // pred_check_branch
      %17 = sbr.rel (0) target = $region9
    $region8: #{bigru_decoder_forward.1} parent=1 // pred_region
      _
    $region9: #{bigru_decoder_forward.1} parent=1 // pred_fallthru
      _
    // Predicated region
    $region10: #{bigru_decoder_forward.1} parent=1 // pred_check
      _
    $region11: #{bigru_decoder_forward.1} parent=1 // pred_check_branch
      %19 = sbr.rel (0) target = $region13
    $region12: #{bigru_decoder_forward.1} parent=1 // pred_region
      _
    $region13: #{bigru_decoder_forward.1} parent=1 // pred_fallthru
      _
    // Predicated region
    $region14: #{bigru_decoder_forward.1} parent=1 // pred_check
      _
    $region15: #{bigru_decoder_forward.1} parent=1 // pred_check_branch
      %21 = sbr.rel (0) target = $region17
    $region16: #{bigru_decoder_forward.1} parent=1 // pred_region
      _
    $region17: #{bigru_decoder_forward.1} parent=1 // pred_fallthru
      _
    // Predicated region
    $region18: #{bigru_decoder_forward.1} parent=1 // pred_check
      _
    $region19: #{bigru_decoder_forward.1} parent=1 // pred_check_branch
      %23 = sbr.rel (0) target = $region21
    $region20: #{bigru_decoder_forward.1} parent=1 // pred_region
      _
    $region21: #{bigru_decoder_forward.1} parent=1 // pred_fallthru
      _
    // Predicated region
    $region22: #{bigru_decoder_forward.1} parent=1 // pred_check
      _
    $region23: #{bigru_decoder_forward.1} parent=1 // pred_check_branch
      %25 = sbr.rel (0) target = $region25
    $region24: #{bigru_decoder_forward.1} parent=1 // pred_region
      _
    $region25: #{bigru_decoder_forward.1} parent=1 // pred_fallthru
      _
    // Predicated region
    $region26: #{bigru_decoder_forward.1} parent=1 // pred_check
      _
    $region27: #{bigru_decoder_forward.1} parent=1 // pred_check_branch
      %27 = sbr.rel (0) target = $region29
    $region28: #{bigru_decoder_forward.1} parent=1 // pred_region
      %s29 = ssub.s32 512, 512
      %30 = vsyncadd [#allocation3], %s29
      %s31 = sshll.u32 [#allocation2], 4
      %s32 = int_to_ptr.vmem [resolvable:$true] %s31
      %37 = dma.hbm_to_vmem [thread:$0]  %s6, 512, %s32, [#allocation3], 128, 128, 8
    $region29: #{bigru_decoder_forward.1} parent=1 // pred_fallthru
      _
    // Predicated region
    $region30: #{bigru_decoder_forward.1} parent=1 // pred_check
      _
    $region31: #{bigru_decoder_forward.1} parent=1 // pred_check_branch
      %39 = sbr.rel (0) target = $region33
    $region32: #{bigru_decoder_forward.1} parent=1 // pred_region
      _
    $region33: #{bigru_decoder_forward.1} parent=1 // pred_fallthru
      _
    // Predicated region
    $region34: #{bigru_decoder_forward.1} parent=1 // pred_check
      _
    $region35: #{bigru_decoder_forward.1} parent=1 // pred_check_branch
      %41 = sbr.rel (0) target = $region37
    $region36: #{bigru_decoder_forward.1} parent=1 // pred_region
      %42 = dma.done [#allocation3], 512
    $region37: #{bigru_decoder_forward.1} parent=1 // pred_fallthru
      _
    %v43 = vld [vmem:[%s0] sm:$0xff]
    %v44 = vld [vmem:[%s0 + $0x8] sm:$0xff]
    %v45 = vld [vmem:[%s0 + $0x10] sm:$0xff]
    %v46 = vld [vmem:[%s0 + $0x18] sm:$0xff]
    %v47 = vld [vmem:[%s0 + $0x20] sm:$0xff]
    %v48 = vld [vmem:[%s0 + $0x28] sm:$0xff]
    %v49 = vld [vmem:[%s0 + $0x30] sm:$0xff]
    %v50 = vlaneseq
    %v51 = vand.u32 %v50, 127
    %52 = vset.pattern.permute.xlu0 0
    %53 = vperm.xlu0 %52, %v43
    %v54 = vpop.permute.xlu0 %53
    %55 = vset.pattern.permute.xlu0 0
    %56 = vperm.xlu0 %55, %v44
    %v57 = vpop.permute.xlu0 %56
    %58 = vset.pattern.permute.xlu0 0
    %59 = vperm.xlu0 %58, %v45
    %v60 = vpop.permute.xlu0 %59
    %61 = vset.pattern.permute.xlu0 0
    %62 = vperm.xlu0 %61, %v46
    %v63 = vpop.permute.xlu0 %62
    %64 = vset.pattern.permute.xlu0 0
    %65 = vperm.xlu0 %64, %v47
    %v66 = vpop.permute.xlu0 %65
    %67 = vset.pattern.permute.xlu0 0
    %68 = vperm.xlu0 %67, %v48
    %v69 = vpop.permute.xlu0 %68
    %70 = vset.pattern.permute.xlu0 0
    %71 = vperm.xlu0 %70, %v49
    %v72 = vpop.permute.xlu0 %71
    %vm73 = vcmp.eq.s32.totalorder %v54, %v51
    %vm74 = vcmp.eq.s32.totalorder %v57, %v51
    %vm75 = vcmp.eq.s32.totalorder %v60, %v51
    %vm76 = vcmp.eq.s32.totalorder %v63, %v51
    %vm77 = vcmp.eq.s32.totalorder %v66, %v51
    %vm78 = vcmp.eq.s32.totalorder %v69, %v51
    %vm79 = vcmp.eq.s32.totalorder %v72, %v51
    %v80 = vsel %vm73, 1.0, 0.0
    %v81 = vsel %vm74, 1.0, 0.0
    %v82 = vsel %vm75, 1.0, 0.0
    %v83 = vsel %vm76, 1.0, 0.0
    %v84 = vsel %vm77, 1.0, 0.0
    %v85 = vsel %vm78, 1.0, 0.0
    %v86 = vsel %vm79, 1.0, 0.0
    %v87 = vld [vmem:[%s2] sm:$0xff]
    %v88 = vld [vmem:[%s2 + $0x8] sm:$0xff]
    %v89 = vld [vmem:[%s2 + $0x10] sm:$0xff]
    %v90 = vld [vmem:[%s2 + $0x18] sm:$0xff]
    %vm91 = vcmask 261120
    %v93 = vsel %vm91, %v80, 0
    %v96 = vsel %vm91, %v81, 0
    %v99 = vsel %vm91, %v82, 0
    %v102 = vsel %vm91, %v83, 0
    %v105 = vsel %vm91, %v84, 0
    %v108 = vsel %vm91, %v85, 0
    %v111 = vsel %vm91, %v86, 0
    %113 = vmatprep.subr.mxu0 0.0
    %114 = vmatpush1.msra.mxu0 0.0
    %115 = vmatprep.subr.mxu0 0.0
    %116 = vmatpush1.msra.mxu0 0.0
    %117 = vmatprep.subr.mxu0 0.0
    %118 = vmatpush1.msra.mxu0 0.0
    %119 = vmatprep.subr.mxu0 0.0
    %120 = vmatpush1.msra.mxu0 0.0
    %121 = vmatprep.subr.mxu0 0.0
    %122 = vmatpush1.msra.mxu0 0.0
    %123 = vmatprep.subr.mxu0 0.0
    %124 = vmatpush1.msra.mxu0 0.0
    %125 = vmatprep.subr.mxu0 0.0
    %126 = vmatpush1.msra.mxu0 0.0
    %127 = vmatprep.subr.mxu0 0.0
    %128 = vmatpush1.msra.mxu0 0.0
    %129 = vmatprep.subr.mxu0 0.0
    %130 = vmatpush1.msra.mxu0 0.0
    %131 = vmatprep.subr.mxu0 0.0
    %132 = vmatpush1.msra.mxu0 0.0
    %133 = vmatprep.subr.mxu0 0.0
    %134 = vmatpush1.msra.mxu0 0.0
    %135 = vmatprep.subr.mxu0 0.0
    %136 = vmatpush1.msra.mxu0 0.0
    %137 = vmatprep.subr.mxu0 0.0
    %138 = vmatpush1.msra.mxu0 %v90
    %139 = vmatprep.subr.mxu0 0.0
    %140 = vmatpush1.msra.mxu0 %v89
    %141 = vmatprep.subr.mxu0 0.0
    %142 = vmatpush1.msra.mxu0 %v88
    %143 = vmatprep.subr.mxu0 0.0
    %144 = vmatpush1.msra.mxu0 %v87
    %145 = vmatprep.subr.mxu0 0.0
    %146 = vmatpush2.msra.mxu0 0.0
    %147 = vmatprep.subr.mxu0 0.0
    %148 = vmatpush2.msra.mxu0 0.0
    %149 = vmatprep.subr.mxu0 0.0
    %150 = vmatpush2.msra.mxu0 0.0
    %151 = vmatprep.subr.mxu0 0.0
    %152 = vmatpush2.msra.mxu0 0.0
    %153 = vmatprep.subr.mxu0 0.0
    %154 = vmatpush2.msra.mxu0 0.0
    %155 = vmatprep.subr.mxu0 0.0
    %156 = vmatpush2.msra.mxu0 0.0
    %157 = vmatprep.subr.mxu0 0.0
    %158 = vmatpush2.msra.mxu0 0.0
    %159 = vmatprep.subr.mxu0 0.0
    %160 = vmatpush2.msra.mxu0 0.0
    %161 = vmatprep.subr.mxu0 0.0
    %162 = vmatpush2.msra.mxu0 0.0
    %163 = vmatprep.subr.mxu0 0.0
    %164 = vmatpush2.msra.mxu0 0.0
    %165 = vmatprep.subr.mxu0 0.0
    %166 = vmatpush2.msra.mxu0 0.0
    %167 = vmatprep.subr.mxu0 0.0
    %168 = vmatpush2.msra.mxu0 0.0
    %169 = vmatprep.subr.mxu0 0.0
    %170 = vmatpush2.msra.mxu0 0.0
    %171 = vmatprep.subr.mxu0 0.0
    %172 = vmatpush2.msra.mxu0 0.0
    %173 = vmatprep.subr.mxu0 0.0
    %174 = vmatpush2.msra.mxu0 0.0
    %175 = vmatprep.subr.mxu0 0.0
    %176 = vmatpush2.msra.mxu0 0.0
    %177 = vmatprep.mubr.f32.mxu0 0.0
    %178 = vmatmul.mubr.f32.gmra.mxu0 %v93
    %v179 = vpop.f32.mrf.mxu0
    %v180 = vadd.f32 0.0, %v179
    %v181 = vpop.f32.mrf.mxu0
    %182 = vmatprep.mubr.f32.mxu0 0.0
    %183 = vmatmul.mubr.f32.gmra.mxu0 %v96
    %v184 = vpop.f32.mrf.mxu0
    %v185 = vadd.f32 0.0, %v184
    %v186 = vpop.f32.mrf.mxu0
    %187 = vmatprep.mubr.f32.mxu0 0.0
    %188 = vmatmul.mubr.f32.gmra.mxu0 %v99
    %v189 = vpop.f32.mrf.mxu0
    %v190 = vadd.f32 0.0, %v189
    %v191 = vpop.f32.mrf.mxu0
    %192 = vmatprep.mubr.f32.mxu0 0.0
    %193 = vmatmul.mubr.f32.gmra.mxu0 %v102
    %v194 = vpop.f32.mrf.mxu0
    %v195 = vadd.f32 0.0, %v194
    %v196 = vpop.f32.mrf.mxu0
    %197 = vmatprep.mubr.f32.mxu0 0.0
    %198 = vmatmul.mubr.f32.gmra.mxu0 %v105
    %v199 = vpop.f32.mrf.mxu0
    %v200 = vadd.f32 0.0, %v199
    %v201 = vpop.f32.mrf.mxu0
    %202 = vmatprep.mubr.f32.mxu0 0.0
    %203 = vmatmul.mubr.f32.gmra.mxu0 %v108
    %v204 = vpop.f32.mrf.mxu0
    %v205 = vadd.f32 0.0, %v204
    %v206 = vpop.f32.mrf.mxu0
    %207 = vmatprep.mubr.f32.mxu0 0.0
    %208 = vmatmul.mubr.f32.gmra.mxu0 %v111
    %v209 = vpop.f32.mrf.mxu0
    %v210 = vadd.f32 0.0, %v209
    %v211 = vpop.f32.mrf.mxu0
    %212 = vdwg.mxu0
    %v213 = vld [vmem:[%s1] sm:$0xff]
    %v214 = vld [vmem:[%s3] sm:$0xff]
    %v215 = vld [vmem:[%s3 + $0x8] sm:$0xff]
    %v216 = vld [vmem:[%s3 + $0x10] sm:$0xff]
    %v217 = vld [vmem:[%s3 + $0x18] sm:$0xff]
    %v218 = vld [vmem:[%s3 + $0x20] sm:$0xff]
    %v219 = vld [vmem:[%s3 + $0x28] sm:$0xff]
    %v220 = vld [vmem:[%s3 + $0x30] sm:$0xff]
    %v221 = vld [vmem:[%s3 + $0x38] sm:$0xff]
    %v222 = vld [vmem:[%s5] sm:$0x3]
    %v223 = vld [vmem:[%s4] sm:$0xff]
    %v224 = vld [vmem:[%s4 + $0x8] sm:$0x1]
    %v225 = vlaneseq
    %v226 = vshrl.u32 %v225, 7
    %v227 = vsub.s32 0, %v226
    %v228 = vrot.slane %v222, %v227
    %v230 = vsel %vm91, %v180, 0
    %v233 = vsel %vm91, %v185, 0
    %v236 = vsel %vm91, %v190, 0
    %v239 = vsel %vm91, %v195, 0
    %v242 = vsel %vm91, %v200, 0
    %v245 = vsel %vm91, %v205, 0
    %v248 = vsel %vm91, %v210, 0
    %250 = vmatprep.subr.mxu0 0.0
    %251 = vmatpush1.msra.mxu0 0.0
    %252 = vmatprep.subr.mxu0 0.0
    %253 = vmatpush1.msra.mxu0 0.0
    %254 = vmatprep.subr.mxu0 0.0
    %255 = vmatpush1.msra.mxu0 0.0
    %256 = vmatprep.subr.mxu0 0.0
    %257 = vmatpush1.msra.mxu0 0.0
    %258 = vmatprep.subr.mxu0 0.0
    %259 = vmatpush1.msra.mxu0 0.0
    %260 = vmatprep.subr.mxu0 0.0
    %261 = vmatpush1.msra.mxu0 0.0
    %262 = vmatprep.subr.mxu0 0.0
    %263 = vmatpush1.msra.mxu0 0.0
    %264 = vmatprep.subr.mxu0 0.0
    %265 = vmatpush1.msra.mxu0 0.0
    %266 = vmatprep.subr.mxu0 0.0
    %267 = vmatpush1.msra.mxu0 0.0
    %268 = vmatprep.subr.mxu0 0.0
    %269 = vmatpush1.msra.mxu0 0.0
    %270 = vmatprep.subr.mxu0 0.0
    %271 = vmatpush1.msra.mxu0 0.0
    %272 = vmatprep.subr.mxu0 0.0
    %273 = vmatpush1.msra.mxu0 0.0
    %274 = vmatprep.subr.mxu0 0.0
    %275 = vmatpush1.msra.mxu0 %v220
    %276 = vmatprep.subr.mxu0 0.0
    %277 = vmatpush1.msra.mxu0 %v218
    %278 = vmatprep.subr.mxu0 0.0
    %279 = vmatpush1.msra.mxu0 %v216
    %280 = vmatprep.subr.mxu0 0.0
    %281 = vmatpush1.msra.mxu0 %v214
    %282 = vmatprep.subr.mxu0 0.0
    %283 = vmatpush2.msra.mxu0 0.0
    %284 = vmatprep.subr.mxu0 0.0
    %285 = vmatpush2.msra.mxu0 0.0
    %286 = vmatprep.subr.mxu0 0.0
    %287 = vmatpush2.msra.mxu0 0.0
    %288 = vmatprep.subr.mxu0 0.0
    %289 = vmatpush2.msra.mxu0 0.0
    %290 = vmatprep.subr.mxu0 0.0
    %291 = vmatpush2.msra.mxu0 0.0
    %292 = vmatprep.subr.mxu0 0.0
    %293 = vmatpush2.msra.mxu0 0.0
    %294 = vmatprep.subr.mxu0 0.0
    %295 = vmatpush2.msra.mxu0 0.0
    %296 = vmatprep.subr.mxu0 0.0
    %297 = vmatpush2.msra.mxu0 0.0
    %298 = vmatprep.subr.mxu0 0.0
    %299 = vmatpush2.msra.mxu0 0.0
    %300 = vmatprep.subr.mxu0 0.0
    %301 = vmatpush2.msra.mxu0 0.0
    %302 = vmatprep.subr.mxu0 0.0
    %303 = vmatpush2.msra.mxu0 0.0
    %304 = vmatprep.subr.mxu0 0.0
    %305 = vmatpush2.msra.mxu0 0.0
    %306 = vmatprep.subr.mxu0 0.0
    %307 = vmatpush2.msra.mxu0 0.0
    %308 = vmatprep.subr.mxu0 0.0
    %309 = vmatpush2.msra.mxu0 0.0
    %310 = vmatprep.subr.mxu0 0.0
    %311 = vmatpush2.msra.mxu0 0.0
    %312 = vmatprep.subr.mxu0 0.0
    %313 = vmatpush2.msra.mxu0 0.0
    %314 = vmatprep.mubr.f32.mxu0 0.0
    %315 = vmatmul.mubr.f32.gmra.mxu0 %v230
    %v316 = vpop.f32.mrf.mxu0
    %v317 = vadd.f32 %v228, %v316
    %v318 = vpop.f32.mrf.mxu0
    %319 = vmatprep.mubr.f32.mxu0 0.0
    %320 = vmatmul.mubr.f32.gmra.mxu0 %v233
    %v321 = vpop.f32.mrf.mxu0
    %v322 = vadd.f32 %v228, %v321
    %v323 = vpop.f32.mrf.mxu0
    %324 = vmatprep.mubr.f32.mxu0 0.0
    %325 = vmatmul.mubr.f32.gmra.mxu0 %v236
    %v326 = vpop.f32.mrf.mxu0
    %v327 = vadd.f32 %v228, %v326
    %v328 = vpop.f32.mrf.mxu0
    %329 = vmatprep.mubr.f32.mxu0 0.0
    %330 = vmatmul.mubr.f32.gmra.mxu0 %v239
    %v331 = vpop.f32.mrf.mxu0
    %v332 = vadd.f32 %v228, %v331
    %v333 = vpop.f32.mrf.mxu0
    %334 = vmatprep.mubr.f32.mxu0 0.0
    %335 = vmatmul.mubr.f32.gmra.mxu0 %v242
    %v336 = vpop.f32.mrf.mxu0
    %v337 = vadd.f32 %v228, %v336
    %v338 = vpop.f32.mrf.mxu0
    %339 = vmatprep.mubr.f32.mxu0 0.0
    %340 = vmatmul.mubr.f32.gmra.mxu0 %v245
    %v341 = vpop.f32.mrf.mxu0
    %v342 = vadd.f32 %v228, %v341
    %v343 = vpop.f32.mrf.mxu0
    %344 = vmatprep.mubr.f32.mxu0 0.0
    %345 = vmatmul.mubr.f32.gmra.mxu0 %v248
    %v346 = vpop.f32.mrf.mxu0
    %v347 = vadd.f32 %v228, %v346
    %v348 = vpop.f32.mrf.mxu0
    %349 = vdwg.mxu0
    %v350 = vlaneseq
    %v351 = vshrl.u32 %v350, 7
    %v352 = vsub.s32 0, %v351
    %v353 = vrot.slane %v224, %v352
    %vm354 = vcmask 64512
    %v356 = vsel %vm354, %v213, 0
    %358 = vmatprep.subr.mxu0 0.0
    %359 = vmatpush1.msra.mxu0 0.0
    %360 = vmatprep.subr.mxu0 0.0
    %361 = vmatpush1.msra.mxu0 0.0
    %362 = vmatprep.subr.mxu0 0.0
    %363 = vmatpush1.msra.mxu0 0.0
    %364 = vmatprep.subr.mxu0 0.0
    %365 = vmatpush1.msra.mxu0 0.0
    %366 = vmatprep.subr.mxu0 0.0
    %367 = vmatpush1.msra.mxu0 0.0
    %368 = vmatprep.subr.mxu0 0.0
    %369 = vmatpush1.msra.mxu0 0.0
    %370 = vmatprep.subr.mxu0 0.0
    %371 = vmatpush1.msra.mxu0 0.0
    %372 = vmatprep.subr.mxu0 0.0
    %373 = vmatpush1.msra.mxu0 0.0
    %374 = vmatprep.subr.mxu0 0.0
    %375 = vmatpush1.msra.mxu0 0.0
    %376 = vmatprep.subr.mxu0 0.0
    %377 = vmatpush1.msra.mxu0 0.0
    %378 = vmatprep.subr.mxu0 0.0
    %379 = vmatpush1.msra.mxu0 0.0
    %380 = vmatprep.subr.mxu0 0.0
    %381 = vmatpush1.msra.mxu0 0.0
    %382 = vmatprep.subr.mxu0 0.0
    %383 = vmatpush1.msra.mxu0 0.0
    %384 = vmatprep.subr.mxu0 0.0
    %385 = vmatpush1.msra.mxu0 0.0
    %386 = vmatprep.subr.mxu0 0.0
    %387 = vmatpush1.msra.mxu0 0.0
    %388 = vmatprep.subr.mxu0 0.0
    %389 = vmatpush1.msra.mxu0 %v223
    %390 = vmatprep.subr.mxu0 0.0
    %391 = vmatpush2.msra.mxu0 0.0
    %392 = vmatprep.subr.mxu0 0.0
    %393 = vmatpush2.msra.mxu0 0.0
    %394 = vmatprep.subr.mxu0 0.0
    %395 = vmatpush2.msra.mxu0 0.0
    %396 = vmatprep.subr.mxu0 0.0
    %397 = vmatpush2.msra.mxu0 0.0
    %398 = vmatprep.subr.mxu0 0.0
    %399 = vmatpush2.msra.mxu0 0.0
    %400 = vmatprep.subr.mxu0 0.0
    %401 = vmatpush2.msra.mxu0 0.0
    %402 = vmatprep.subr.mxu0 0.0
    %403 = vmatpush2.msra.mxu0 0.0
    %404 = vmatprep.subr.mxu0 0.0
    %405 = vmatpush2.msra.mxu0 0.0
    %406 = vmatprep.subr.mxu0 0.0
    %407 = vmatpush2.msra.mxu0 0.0
    %408 = vmatprep.subr.mxu0 0.0
    %409 = vmatpush2.msra.mxu0 0.0
    %410 = vmatprep.subr.mxu0 0.0
    %411 = vmatpush2.msra.mxu0 0.0
    %412 = vmatprep.subr.mxu0 0.0
    %413 = vmatpush2.msra.mxu0 0.0
    %414 = vmatprep.subr.mxu0 0.0
    %415 = vmatpush2.msra.mxu0 0.0
    %416 = vmatprep.subr.mxu0 0.0
    %417 = vmatpush2.msra.mxu0 0.0
    %418 = vmatprep.subr.mxu0 0.0
    %419 = vmatpush2.msra.mxu0 0.0
    %420 = vmatprep.subr.mxu0 0.0
    %421 = vmatpush2.msra.mxu0 0.0
    %422 = vmatprep.mubr.f32.mxu0 0.0
    %423 = vmatmul.mubr.f32.gmra.mxu0 %v356
    %v424 = vpop.f32.mrf.mxu0
    %v425 = vadd.f32 %v353, %v424
    %v426 = vpop.f32.mrf.mxu0
    %427 = vdwg.mxu0
    %v428 = vlaneseq
    %v429 = vshrl.u32 %v428, 7
    %v430 = vsub.s32 1, %v429
    %v431 = vrot.slane %v222, %v430
    %v433 = vsel %vm91, %v425, 0
    %435 = vmatprep.subr.mxu0 0.0
    %436 = vmatpush1.msra.mxu0 0.0
    %437 = vmatprep.subr.mxu0 0.0
    %438 = vmatpush1.msra.mxu0 0.0
    %439 = vmatprep.subr.mxu0 0.0
    %440 = vmatpush1.msra.mxu0 0.0
    %441 = vmatprep.subr.mxu0 0.0
    %442 = vmatpush1.msra.mxu0 0.0
    %443 = vmatprep.subr.mxu0 0.0
    %444 = vmatpush1.msra.mxu0 0.0
    %445 = vmatprep.subr.mxu0 0.0
    %446 = vmatpush1.msra.mxu0 0.0
    %447 = vmatprep.subr.mxu0 0.0
    %448 = vmatpush1.msra.mxu0 0.0
    %449 = vmatprep.subr.mxu0 0.0
    %450 = vmatpush1.msra.mxu0 0.0
    %451 = vmatprep.subr.mxu0 0.0
    %452 = vmatpush1.msra.mxu0 0.0
    %453 = vmatprep.subr.mxu0 0.0
    %454 = vmatpush1.msra.mxu0 0.0
    %455 = vmatprep.subr.mxu0 0.0
    %456 = vmatpush1.msra.mxu0 0.0
    %457 = vmatprep.subr.mxu0 0.0
    %458 = vmatpush1.msra.mxu0 0.0
    %459 = vmatprep.subr.mxu0 0.0
    %460 = vmatpush1.msra.mxu0 %v221
    %461 = vmatprep.subr.mxu0 0.0
    %462 = vmatpush1.msra.mxu0 %v219
    %463 = vmatprep.subr.mxu0 0.0
    %464 = vmatpush1.msra.mxu0 %v217
    %465 = vmatprep.subr.mxu0 0.0
    %466 = vmatpush1.msra.mxu0 %v215
    %467 = vmatprep.subr.mxu0 0.0
    %468 = vmatpush2.msra.mxu0 0.0
    %469 = vmatprep.subr.mxu0 0.0
    %470 = vmatpush2.msra.mxu0 0.0
    %471 = vmatprep.subr.mxu0 0.0
    %472 = vmatpush2.msra.mxu0 0.0
    %473 = vmatprep.subr.mxu0 0.0
    %474 = vmatpush2.msra.mxu0 0.0
    %475 = vmatprep.subr.mxu0 0.0
    %476 = vmatpush2.msra.mxu0 0.0
    %477 = vmatprep.subr.mxu0 0.0
    %478 = vmatpush2.msra.mxu0 0.0
    %479 = vmatprep.subr.mxu0 0.0
    %480 = vmatpush2.msra.mxu0 0.0
    %481 = vmatprep.subr.mxu0 0.0
    %482 = vmatpush2.msra.mxu0 0.0
    %483 = vmatprep.subr.mxu0 0.0
    %484 = vmatpush2.msra.mxu0 0.0
    %485 = vmatprep.subr.mxu0 0.0
    %486 = vmatpush2.msra.mxu0 0.0
    %487 = vmatprep.subr.mxu0 0.0
    %488 = vmatpush2.msra.mxu0 0.0
    %489 = vmatprep.subr.mxu0 0.0
    %490 = vmatpush2.msra.mxu0 0.0
    %491 = vmatprep.subr.mxu0 0.0
    %492 = vmatpush2.msra.mxu0 0.0
    %493 = vmatprep.subr.mxu0 0.0
    %494 = vmatpush2.msra.mxu0 0.0
    %495 = vmatprep.subr.mxu0 0.0
    %496 = vmatpush2.msra.mxu0 0.0
    %497 = vmatprep.subr.mxu0 0.0
    %498 = vmatpush2.msra.mxu0 0.0
    %499 = vmatprep.mubr.f32.mxu0 0.0
    %500 = vmatmul.mubr.f32.gmra.mxu0 %v433
    %v501 = vpop.f32.mrf.mxu0
    %v502 = vadd.f32 %v431, %v501
    %v503 = vpop.f32.mrf.mxu0
    %504 = vdwg.mxu0
    %v505 = vadd.f32 %v317, %v502
    %v506 = vxor.u32 %v505, 2147483648
    %v507 = vmul.f32 %v506, 1.442695
    %v508 = vpow.pop %v507
    %v509 = vadd.f32 %v508, 1.0
    %v510 = vrcp.pop %v509
    %v511 = vmul.f32 1.0, %v510
    %513 = vrot.lane.b32.xlu0 %v502, 64
    %v514 = vpop.permute.xlu0 %513
    %v516 = vmul.f32 %v511, %v514
    %518 = vrot.lane.b32.xlu0 %v516, 64
    %v519 = vpop.permute.xlu0 %518
    %v521 = vadd.f32 %v317, %v519
    %v522 = vtanh.pop %v521
    %v523 = vsub.f32 1.0, %v511
    %525 = vrot.lane.b32.xlu0 %v522, 96
    %v526 = vpop.permute.xlu0 %525
    %v528 = vmul.f32 %v523, %v526
    %529 = vrot.lane.b32.xlu0 %v425, 32
    %v530 = vpop.permute.xlu0 %529
    %v532 = vmul.f32 %v511, %v530
    %v533 = vadd.f32 %v528, %v532
    %535 = vrot.lane.b32.xlu0 %v533, 96
    %v536 = vpop.permute.xlu0 %535
    %v537 = vsel %vm91, %v536, 0
    %539 = vmatprep.subr.mxu0 0.0
    %540 = vmatpush1.msra.mxu0 0.0
    %541 = vmatprep.subr.mxu0 0.0
    %542 = vmatpush1.msra.mxu0 0.0
    %543 = vmatprep.subr.mxu0 0.0
    %544 = vmatpush1.msra.mxu0 0.0
    %545 = vmatprep.subr.mxu0 0.0
    %546 = vmatpush1.msra.mxu0 0.0
    %547 = vmatprep.subr.mxu0 0.0
    %548 = vmatpush1.msra.mxu0 0.0
    %549 = vmatprep.subr.mxu0 0.0
    %550 = vmatpush1.msra.mxu0 0.0
    %551 = vmatprep.subr.mxu0 0.0
    %552 = vmatpush1.msra.mxu0 0.0
    %553 = vmatprep.subr.mxu0 0.0
    %554 = vmatpush1.msra.mxu0 0.0
    %555 = vmatprep.subr.mxu0 0.0
    %556 = vmatpush1.msra.mxu0 0.0
    %557 = vmatprep.subr.mxu0 0.0
    %558 = vmatpush1.msra.mxu0 0.0
    %559 = vmatprep.subr.mxu0 0.0
    %560 = vmatpush1.msra.mxu0 0.0
    %561 = vmatprep.subr.mxu0 0.0
    %562 = vmatpush1.msra.mxu0 0.0
    %563 = vmatprep.subr.mxu0 0.0
    %564 = vmatpush1.msra.mxu0 %v221
    %565 = vmatprep.subr.mxu0 0.0
    %566 = vmatpush1.msra.mxu0 %v219
    %567 = vmatprep.subr.mxu0 0.0
    %568 = vmatpush1.msra.mxu0 %v217
    %569 = vmatprep.subr.mxu0 0.0
    %570 = vmatpush1.msra.mxu0 %v215
    %571 = vmatprep.subr.mxu0 0.0
    %572 = vmatpush2.msra.mxu0 0.0
    %573 = vmatprep.subr.mxu0 0.0
    %574 = vmatpush2.msra.mxu0 0.0
    %575 = vmatprep.subr.mxu0 0.0
    %576 = vmatpush2.msra.mxu0 0.0
    %577 = vmatprep.subr.mxu0 0.0
    %578 = vmatpush2.msra.mxu0 0.0
    %579 = vmatprep.subr.mxu0 0.0
    %580 = vmatpush2.msra.mxu0 0.0
    %581 = vmatprep.subr.mxu0 0.0
    %582 = vmatpush2.msra.mxu0 0.0
    %583 = vmatprep.subr.mxu0 0.0
    %584 = vmatpush2.msra.mxu0 0.0
    %585 = vmatprep.subr.mxu0 0.0
    %586 = vmatpush2.msra.mxu0 0.0
    %587 = vmatprep.subr.mxu0 0.0
    %588 = vmatpush2.msra.mxu0 0.0
    %589 = vmatprep.subr.mxu0 0.0
    %590 = vmatpush2.msra.mxu0 0.0
    %591 = vmatprep.subr.mxu0 0.0
    %592 = vmatpush2.msra.mxu0 0.0
    %593 = vmatprep.subr.mxu0 0.0
    %594 = vmatpush2.msra.mxu0 0.0
    %595 = vmatprep.subr.mxu0 0.0
    %596 = vmatpush2.msra.mxu0 0.0
    %597 = vmatprep.subr.mxu0 0.0
    %598 = vmatpush2.msra.mxu0 0.0
    %599 = vmatprep.subr.mxu0 0.0
    %600 = vmatpush2.msra.mxu0 0.0
    %601 = vmatprep.subr.mxu0 0.0
    %602 = vmatpush2.msra.mxu0 0.0
    %603 = vmatprep.mubr.f32.mxu0 0.0
    %604 = vmatmul.mubr.f32.gmra.mxu0 %v537
    %v605 = vpop.f32.mrf.mxu0
    %v606 = vadd.f32 %v431, %v605
    %v607 = vpop.f32.mrf.mxu0
    %608 = vdwg.mxu0
    %v609 = vadd.f32 %v322, %v606
    %v610 = vxor.u32 %v609, 2147483648
    %v611 = vmul.f32 %v610, 1.442695
    %v612 = vpow.pop %v611
    %v613 = vadd.f32 %v612, 1.0
    %v614 = vrcp.pop %v613
    %v615 = vmul.f32 1.0, %v614
    %617 = vrot.lane.b32.xlu0 %v606, 64
    %v618 = vpop.permute.xlu0 %617
    %v620 = vmul.f32 %v615, %v618
    %622 = vrot.lane.b32.xlu0 %v620, 64
    %v623 = vpop.permute.xlu0 %622
    %v625 = vadd.f32 %v322, %v623
    %v626 = vtanh.pop %v625
    %v627 = vsub.f32 1.0, %v615
    %629 = vrot.lane.b32.xlu0 %v626, 96
    %v630 = vpop.permute.xlu0 %629
    %v632 = vmul.f32 %v627, %v630
    %v633 = vmul.f32 %v615, %v533
    %v634 = vadd.f32 %v632, %v633
    %636 = vrot.lane.b32.xlu0 %v634, 96
    %v637 = vpop.permute.xlu0 %636
    %v638 = vsel %vm91, %v637, 0
    %640 = vmatprep.subr.mxu0 0.0
    %641 = vmatpush1.msra.mxu0 0.0
    %642 = vmatprep.subr.mxu0 0.0
    %643 = vmatpush1.msra.mxu0 0.0
    %644 = vmatprep.subr.mxu0 0.0
    %645 = vmatpush1.msra.mxu0 0.0
    %646 = vmatprep.subr.mxu0 0.0
    %647 = vmatpush1.msra.mxu0 0.0
    %648 = vmatprep.subr.mxu0 0.0
    %649 = vmatpush1.msra.mxu0 0.0
    %650 = vmatprep.subr.mxu0 0.0
    %651 = vmatpush1.msra.mxu0 0.0
    %652 = vmatprep.subr.mxu0 0.0
    %653 = vmatpush1.msra.mxu0 0.0
    %654 = vmatprep.subr.mxu0 0.0
    %655 = vmatpush1.msra.mxu0 0.0
    %656 = vmatprep.subr.mxu0 0.0
    %657 = vmatpush1.msra.mxu0 0.0
    %658 = vmatprep.subr.mxu0 0.0
    %659 = vmatpush1.msra.mxu0 0.0
    %660 = vmatprep.subr.mxu0 0.0
    %661 = vmatpush1.msra.mxu0 0.0
    %662 = vmatprep.subr.mxu0 0.0
    %663 = vmatpush1.msra.mxu0 0.0
    %664 = vmatprep.subr.mxu0 0.0
    %665 = vmatpush1.msra.mxu0 %v221
    %666 = vmatprep.subr.mxu0 0.0
    %667 = vmatpush1.msra.mxu0 %v219
    %668 = vmatprep.subr.mxu0 0.0
    %669 = vmatpush1.msra.mxu0 %v217
    %670 = vmatprep.subr.mxu0 0.0
    %671 = vmatpush1.msra.mxu0 %v215
    %672 = vmatprep.subr.mxu0 0.0
    %673 = vmatpush2.msra.mxu0 0.0
    %674 = vmatprep.subr.mxu0 0.0
    %675 = vmatpush2.msra.mxu0 0.0
    %676 = vmatprep.subr.mxu0 0.0
    %677 = vmatpush2.msra.mxu0 0.0
    %678 = vmatprep.subr.mxu0 0.0
    %679 = vmatpush2.msra.mxu0 0.0
    %680 = vmatprep.subr.mxu0 0.0
    %681 = vmatpush2.msra.mxu0 0.0
    %682 = vmatprep.subr.mxu0 0.0
    %683 = vmatpush2.msra.mxu0 0.0
    %684 = vmatprep.subr.mxu0 0.0
    %685 = vmatpush2.msra.mxu0 0.0
    %686 = vmatprep.subr.mxu0 0.0
    %687 = vmatpush2.msra.mxu0 0.0
    %688 = vmatprep.subr.mxu0 0.0
    %689 = vmatpush2.msra.mxu0 0.0
    %690 = vmatprep.subr.mxu0 0.0
    %691 = vmatpush2.msra.mxu0 0.0
    %692 = vmatprep.subr.mxu0 0.0
    %693 = vmatpush2.msra.mxu0 0.0
    %694 = vmatprep.subr.mxu0 0.0
    %695 = vmatpush2.msra.mxu0 0.0
    %696 = vmatprep.subr.mxu0 0.0
    %697 = vmatpush2.msra.mxu0 0.0
    %698 = vmatprep.subr.mxu0 0.0
    %699 = vmatpush2.msra.mxu0 0.0
    %700 = vmatprep.subr.mxu0 0.0
    %701 = vmatpush2.msra.mxu0 0.0
    %702 = vmatprep.subr.mxu0 0.0
    %703 = vmatpush2.msra.mxu0 0.0
    %704 = vmatprep.mubr.f32.mxu0 0.0
    %705 = vmatmul.mubr.f32.gmra.mxu0 %v638
    %v706 = vpop.f32.mrf.mxu0
    %v707 = vadd.f32 %v431, %v706
    %v708 = vpop.f32.mrf.mxu0
    %709 = vdwg.mxu0
    %v710 = vadd.f32 %v327, %v707
    %v711 = vxor.u32 %v710, 2147483648
    %v712 = vmul.f32 %v711, 1.442695
    %v713 = vpow.pop %v712
    %v714 = vadd.f32 %v713, 1.0
    %v715 = vrcp.pop %v714
    %v716 = vmul.f32 1.0, %v715
    %718 = vrot.lane.b32.xlu0 %v707, 64
    %v719 = vpop.permute.xlu0 %718
    %v721 = vmul.f32 %v716, %v719
    %723 = vrot.lane.b32.xlu0 %v721, 64
    %v724 = vpop.permute.xlu0 %723
    %v726 = vadd.f32 %v327, %v724
    %v727 = vtanh.pop %v726
    %v728 = vsub.f32 1.0, %v716
    %730 = vrot.lane.b32.xlu0 %v727, 96
    %v731 = vpop.permute.xlu0 %730
    %v733 = vmul.f32 %v728, %v731
    %v734 = vmul.f32 %v716, %v634
    %v735 = vadd.f32 %v733, %v734
    %737 = vrot.lane.b32.xlu0 %v735, 96
    %v738 = vpop.permute.xlu0 %737
    %v739 = vsel %vm91, %v738, 0
    %741 = vmatprep.subr.mxu0 0.0
    %742 = vmatpush1.msra.mxu0 0.0
    %743 = vmatprep.subr.mxu0 0.0
    %744 = vmatpush1.msra.mxu0 0.0
    %745 = vmatprep.subr.mxu0 0.0
    %746 = vmatpush1.msra.mxu0 0.0
    %747 = vmatprep.subr.mxu0 0.0
    %748 = vmatpush1.msra.mxu0 0.0
    %749 = vmatprep.subr.mxu0 0.0
    %750 = vmatpush1.msra.mxu0 0.0
    %751 = vmatprep.subr.mxu0 0.0
    %752 = vmatpush1.msra.mxu0 0.0
    %753 = vmatprep.subr.mxu0 0.0
    %754 = vmatpush1.msra.mxu0 0.0
    %755 = vmatprep.subr.mxu0 0.0
    %756 = vmatpush1.msra.mxu0 0.0
    %757 = vmatprep.subr.mxu0 0.0
    %758 = vmatpush1.msra.mxu0 0.0
    %759 = vmatprep.subr.mxu0 0.0
    %760 = vmatpush1.msra.mxu0 0.0
    %761 = vmatprep.subr.mxu0 0.0
    %762 = vmatpush1.msra.mxu0 0.0
    %763 = vmatprep.subr.mxu0 0.0
    %764 = vmatpush1.msra.mxu0 0.0
    %765 = vmatprep.subr.mxu0 0.0
    %766 = vmatpush1.msra.mxu0 %v221
    %767 = vmatprep.subr.mxu0 0.0
    %768 = vmatpush1.msra.mxu0 %v219
    %769 = vmatprep.subr.mxu0 0.0
    %770 = vmatpush1.msra.mxu0 %v217
    %771 = vmatprep.subr.mxu0 0.0
    %772 = vmatpush1.msra.mxu0 %v215
    %773 = vmatprep.subr.mxu0 0.0
    %774 = vmatpush2.msra.mxu0 0.0
    %775 = vmatprep.subr.mxu0 0.0
    %776 = vmatpush2.msra.mxu0 0.0
    %777 = vmatprep.subr.mxu0 0.0
    %778 = vmatpush2.msra.mxu0 0.0
    %779 = vmatprep.subr.mxu0 0.0
    %780 = vmatpush2.msra.mxu0 0.0
    %781 = vmatprep.subr.mxu0 0.0
    %782 = vmatpush2.msra.mxu0 0.0
    %783 = vmatprep.subr.mxu0 0.0
    %784 = vmatpush2.msra.mxu0 0.0
    %785 = vmatprep.subr.mxu0 0.0
    %786 = vmatpush2.msra.mxu0 0.0
    %787 = vmatprep.subr.mxu0 0.0
    %788 = vmatpush2.msra.mxu0 0.0
    %789 = vmatprep.subr.mxu0 0.0
    %790 = vmatpush2.msra.mxu0 0.0
    %791 = vmatprep.subr.mxu0 0.0
    %792 = vmatpush2.msra.mxu0 0.0
    %793 = vmatprep.subr.mxu0 0.0
    %794 = vmatpush2.msra.mxu0 0.0
    %795 = vmatprep.subr.mxu0 0.0
    %796 = vmatpush2.msra.mxu0 0.0
    %797 = vmatprep.subr.mxu0 0.0
    %798 = vmatpush2.msra.mxu0 0.0
    %799 = vmatprep.subr.mxu0 0.0
    %800 = vmatpush2.msra.mxu0 0.0
    %801 = vmatprep.subr.mxu0 0.0
    %802 = vmatpush2.msra.mxu0 0.0
    %803 = vmatprep.subr.mxu0 0.0
    %804 = vmatpush2.msra.mxu0 0.0
    %805 = vmatprep.mubr.f32.mxu0 0.0
    %806 = vmatmul.mubr.f32.gmra.mxu0 %v739
    %v807 = vpop.f32.mrf.mxu0
    %v808 = vadd.f32 %v431, %v807
    %v809 = vpop.f32.mrf.mxu0
    %810 = vdwg.mxu0
    %v811 = vadd.f32 %v332, %v808
    %v812 = vxor.u32 %v811, 2147483648
    %v813 = vmul.f32 %v812, 1.442695
    %v814 = vpow.pop %v813
    %v815 = vadd.f32 %v814, 1.0
    %v816 = vrcp.pop %v815
    %v817 = vmul.f32 1.0, %v816
    %819 = vrot.lane.b32.xlu0 %v808, 64
    %v820 = vpop.permute.xlu0 %819
    %v822 = vmul.f32 %v817, %v820
    %824 = vrot.lane.b32.xlu0 %v822, 64
    %v825 = vpop.permute.xlu0 %824
    %v827 = vadd.f32 %v332, %v825
    %v828 = vtanh.pop %v827
    %v829 = vsub.f32 1.0, %v817
    %831 = vrot.lane.b32.xlu0 %v828, 96
    %v832 = vpop.permute.xlu0 %831
    %v834 = vmul.f32 %v829, %v832
    %v835 = vmul.f32 %v817, %v735
    %v836 = vadd.f32 %v834, %v835
    %838 = vrot.lane.b32.xlu0 %v836, 96
    %v839 = vpop.permute.xlu0 %838
    %v840 = vsel %vm91, %v839, 0
    %842 = vmatprep.subr.mxu0 0.0
    %843 = vmatpush1.msra.mxu0 0.0
    %844 = vmatprep.subr.mxu0 0.0
    %845 = vmatpush1.msra.mxu0 0.0
    %846 = vmatprep.subr.mxu0 0.0
    %847 = vmatpush1.msra.mxu0 0.0
    %848 = vmatprep.subr.mxu0 0.0
    %849 = vmatpush1.msra.mxu0 0.0
    %850 = vmatprep.subr.mxu0 0.0
    %851 = vmatpush1.msra.mxu0 0.0
    %852 = vmatprep.subr.mxu0 0.0
    %853 = vmatpush1.msra.mxu0 0.0
    %854 = vmatprep.subr.mxu0 0.0
    %855 = vmatpush1.msra.mxu0 0.0
    %856 = vmatprep.subr.mxu0 0.0
    %857 = vmatpush1.msra.mxu0 0.0
    %858 = vmatprep.subr.mxu0 0.0
    %859 = vmatpush1.msra.mxu0 0.0
    %860 = vmatprep.subr.mxu0 0.0
    %861 = vmatpush1.msra.mxu0 0.0
    %862 = vmatprep.subr.mxu0 0.0
    %863 = vmatpush1.msra.mxu0 0.0
    %864 = vmatprep.subr.mxu0 0.0
    %865 = vmatpush1.msra.mxu0 0.0
    %866 = vmatprep.subr.mxu0 0.0
    %867 = vmatpush1.msra.mxu0 %v221
    %868 = vmatprep.subr.mxu0 0.0
    %869 = vmatpush1.msra.mxu0 %v219
    %870 = vmatprep.subr.mxu0 0.0
    %871 = vmatpush1.msra.mxu0 %v217
    %872 = vmatprep.subr.mxu0 0.0
    %873 = vmatpush1.msra.mxu0 %v215
    %874 = vmatprep.subr.mxu0 0.0
    %875 = vmatpush2.msra.mxu0 0.0
    %876 = vmatprep.subr.mxu0 0.0
    %877 = vmatpush2.msra.mxu0 0.0
    %878 = vmatprep.subr.mxu0 0.0
    %879 = vmatpush2.msra.mxu0 0.0
    %880 = vmatprep.subr.mxu0 0.0
    %881 = vmatpush2.msra.mxu0 0.0
    %882 = vmatprep.subr.mxu0 0.0
    %883 = vmatpush2.msra.mxu0 0.0
    %884 = vmatprep.subr.mxu0 0.0
    %885 = vmatpush2.msra.mxu0 0.0
    %886 = vmatprep.subr.mxu0 0.0
    %887 = vmatpush2.msra.mxu0 0.0
    %888 = vmatprep.subr.mxu0 0.0
    %889 = vmatpush2.msra.mxu0 0.0
    %890 = vmatprep.subr.mxu0 0.0
    %891 = vmatpush2.msra.mxu0 0.0
    %892 = vmatprep.subr.mxu0 0.0
    %893 = vmatpush2.msra.mxu0 0.0
    %894 = vmatprep.subr.mxu0 0.0
    %895 = vmatpush2.msra.mxu0 0.0
    %896 = vmatprep.subr.mxu0 0.0
    %897 = vmatpush2.msra.mxu0 0.0
    %898 = vmatprep.subr.mxu0 0.0
    %899 = vmatpush2.msra.mxu0 0.0
    %900 = vmatprep.subr.mxu0 0.0
    %901 = vmatpush2.msra.mxu0 0.0
    %902 = vmatprep.subr.mxu0 0.0
    %903 = vmatpush2.msra.mxu0 0.0
    %904 = vmatprep.subr.mxu0 0.0
    %905 = vmatpush2.msra.mxu0 0.0
    %906 = vmatprep.mubr.f32.mxu0 0.0
    %907 = vmatmul.mubr.f32.gmra.mxu0 %v840
    %v908 = vpop.f32.mrf.mxu0
    %v909 = vadd.f32 %v431, %v908
    %v910 = vpop.f32.mrf.mxu0
    %911 = vdwg.mxu0
    %v912 = vadd.f32 %v337, %v909
    %v913 = vxor.u32 %v912, 2147483648
    %v914 = vmul.f32 %v913, 1.442695
    %v915 = vpow.pop %v914
    %v916 = vadd.f32 %v915, 1.0
    %v917 = vrcp.pop %v916
    %v918 = vmul.f32 1.0, %v917
    %920 = vrot.lane.b32.xlu0 %v909, 64
    %v921 = vpop.permute.xlu0 %920
    %v923 = vmul.f32 %v918, %v921
    %925 = vrot.lane.b32.xlu0 %v923, 64
    %v926 = vpop.permute.xlu0 %925
    %v928 = vadd.f32 %v337, %v926
    %v929 = vtanh.pop %v928
    %v930 = vsub.f32 1.0, %v918
    %932 = vrot.lane.b32.xlu0 %v929, 96
    %v933 = vpop.permute.xlu0 %932
    %v935 = vmul.f32 %v930, %v933
    %v936 = vmul.f32 %v918, %v836
    %v937 = vadd.f32 %v935, %v936
    %939 = vrot.lane.b32.xlu0 %v937, 96
    %v940 = vpop.permute.xlu0 %939
    %v941 = vsel %vm91, %v940, 0
    %943 = vmatprep.subr.mxu0 0.0
    %944 = vmatpush1.msra.mxu0 0.0
    %945 = vmatprep.subr.mxu0 0.0
    %946 = vmatpush1.msra.mxu0 0.0
    %947 = vmatprep.subr.mxu0 0.0
    %948 = vmatpush1.msra.mxu0 0.0
    %949 = vmatprep.subr.mxu0 0.0
    %950 = vmatpush1.msra.mxu0 0.0
    %951 = vmatprep.subr.mxu0 0.0
    %952 = vmatpush1.msra.mxu0 0.0
    %953 = vmatprep.subr.mxu0 0.0
    %954 = vmatpush1.msra.mxu0 0.0
    %955 = vmatprep.subr.mxu0 0.0
    %956 = vmatpush1.msra.mxu0 0.0
    %957 = vmatprep.subr.mxu0 0.0
    %958 = vmatpush1.msra.mxu0 0.0
    %959 = vmatprep.subr.mxu0 0.0
    %960 = vmatpush1.msra.mxu0 0.0
    %961 = vmatprep.subr.mxu0 0.0
    %962 = vmatpush1.msra.mxu0 0.0
    %963 = vmatprep.subr.mxu0 0.0
    %964 = vmatpush1.msra.mxu0 0.0
    %965 = vmatprep.subr.mxu0 0.0
    %966 = vmatpush1.msra.mxu0 0.0
    %967 = vmatprep.subr.mxu0 0.0
    %968 = vmatpush1.msra.mxu0 %v221
    %969 = vmatprep.subr.mxu0 0.0
    %970 = vmatpush1.msra.mxu0 %v219
    %971 = vmatprep.subr.mxu0 0.0
    %972 = vmatpush1.msra.mxu0 %v217
    %973 = vmatprep.subr.mxu0 0.0
    %974 = vmatpush1.msra.mxu0 %v215
    %975 = vmatprep.subr.mxu0 0.0
    %976 = vmatpush2.msra.mxu0 0.0
    %977 = vmatprep.subr.mxu0 0.0
    %978 = vmatpush2.msra.mxu0 0.0
    %979 = vmatprep.subr.mxu0 0.0
    %980 = vmatpush2.msra.mxu0 0.0
    %981 = vmatprep.subr.mxu0 0.0
    %982 = vmatpush2.msra.mxu0 0.0
    %983 = vmatprep.subr.mxu0 0.0
    %984 = vmatpush2.msra.mxu0 0.0
    %985 = vmatprep.subr.mxu0 0.0
    %986 = vmatpush2.msra.mxu0 0.0
    %987 = vmatprep.subr.mxu0 0.0
    %988 = vmatpush2.msra.mxu0 0.0
    %989 = vmatprep.subr.mxu0 0.0
    %990 = vmatpush2.msra.mxu0 0.0
    %991 = vmatprep.subr.mxu0 0.0
    %992 = vmatpush2.msra.mxu0 0.0
    %993 = vmatprep.subr.mxu0 0.0
    %994 = vmatpush2.msra.mxu0 0.0
    %995 = vmatprep.subr.mxu0 0.0
    %996 = vmatpush2.msra.mxu0 0.0
    %997 = vmatprep.subr.mxu0 0.0
    %998 = vmatpush2.msra.mxu0 0.0
    %999 = vmatprep.subr.mxu0 0.0
    %1000 = vmatpush2.msra.mxu0 0.0
    %1001 = vmatprep.subr.mxu0 0.0
    %1002 = vmatpush2.msra.mxu0 0.0
    %1003 = vmatprep.subr.mxu0 0.0
    %1004 = vmatpush2.msra.mxu0 0.0
    %1005 = vmatprep.subr.mxu0 0.0
    %1006 = vmatpush2.msra.mxu0 0.0
    %1007 = vmatprep.mubr.f32.mxu0 0.0
    %1008 = vmatmul.mubr.f32.gmra.mxu0 %v941
    %v1009 = vpop.f32.mrf.mxu0
    %v1010 = vadd.f32 %v431, %v1009
    %v1011 = vpop.f32.mrf.mxu0
    %1012 = vdwg.mxu0
    %v1013 = vadd.f32 %v342, %v1010
    %v1014 = vxor.u32 %v1013, 2147483648
    %v1015 = vmul.f32 %v1014, 1.442695
    %v1016 = vpow.pop %v1015
    %v1017 = vadd.f32 %v1016, 1.0
    %v1018 = vrcp.pop %v1017
    %v1019 = vmul.f32 1.0, %v1018
    %1021 = vrot.lane.b32.xlu0 %v1010, 64
    %v1022 = vpop.permute.xlu0 %1021
    %v1024 = vmul.f32 %v1019, %v1022
    %1026 = vrot.lane.b32.xlu0 %v1024, 64
    %v1027 = vpop.permute.xlu0 %1026
    %v1029 = vadd.f32 %v342, %v1027
    %v1030 = vtanh.pop %v1029
    %v1031 = vsub.f32 1.0, %v1019
    %1033 = vrot.lane.b32.xlu0 %v1030, 96
    %v1034 = vpop.permute.xlu0 %1033
    %v1036 = vmul.f32 %v1031, %v1034
    %v1037 = vmul.f32 %v1019, %v937
    %v1038 = vadd.f32 %v1036, %v1037
    %1040 = vrot.lane.b32.xlu0 %v1038, 96
    %v1041 = vpop.permute.xlu0 %1040
    %v1042 = vsel %vm91, %v1041, 0
    %1044 = vmatprep.subr.mxu0 0.0
    %1045 = vmatpush1.msra.mxu0 0.0
    %1046 = vmatprep.subr.mxu0 0.0
    %1047 = vmatpush1.msra.mxu0 0.0
    %1048 = vmatprep.subr.mxu0 0.0
    %1049 = vmatpush1.msra.mxu0 0.0
    %1050 = vmatprep.subr.mxu0 0.0
    %1051 = vmatpush1.msra.mxu0 0.0
    %1052 = vmatprep.subr.mxu0 0.0
    %1053 = vmatpush1.msra.mxu0 0.0
    %1054 = vmatprep.subr.mxu0 0.0
    %1055 = vmatpush1.msra.mxu0 0.0
    %1056 = vmatprep.subr.mxu0 0.0
    %1057 = vmatpush1.msra.mxu0 0.0
    %1058 = vmatprep.subr.mxu0 0.0
    %1059 = vmatpush1.msra.mxu0 0.0
    %1060 = vmatprep.subr.mxu0 0.0
    %1061 = vmatpush1.msra.mxu0 0.0
    %1062 = vmatprep.subr.mxu0 0.0
    %1063 = vmatpush1.msra.mxu0 0.0
    %1064 = vmatprep.subr.mxu0 0.0
    %1065 = vmatpush1.msra.mxu0 0.0
    %1066 = vmatprep.subr.mxu0 0.0
    %1067 = vmatpush1.msra.mxu0 0.0
    %1068 = vmatprep.subr.mxu0 0.0
    %1069 = vmatpush1.msra.mxu0 %v221
    %1070 = vmatprep.subr.mxu0 0.0
    %1071 = vmatpush1.msra.mxu0 %v219
    %1072 = vmatprep.subr.mxu0 0.0
    %1073 = vmatpush1.msra.mxu0 %v217
    %1074 = vmatprep.subr.mxu0 0.0
    %1075 = vmatpush1.msra.mxu0 %v215
    %1076 = vmatprep.subr.mxu0 0.0
    %1077 = vmatpush2.msra.mxu0 0.0
    %1078 = vmatprep.subr.mxu0 0.0
    %1079 = vmatpush2.msra.mxu0 0.0
    %1080 = vmatprep.subr.mxu0 0.0
    %1081 = vmatpush2.msra.mxu0 0.0
    %1082 = vmatprep.subr.mxu0 0.0
    %1083 = vmatpush2.msra.mxu0 0.0
    %1084 = vmatprep.subr.mxu0 0.0
    %1085 = vmatpush2.msra.mxu0 0.0
    %1086 = vmatprep.subr.mxu0 0.0
    %1087 = vmatpush2.msra.mxu0 0.0
    %1088 = vmatprep.subr.mxu0 0.0
    %1089 = vmatpush2.msra.mxu0 0.0
    %1090 = vmatprep.subr.mxu0 0.0
    %1091 = vmatpush2.msra.mxu0 0.0
    %1092 = vmatprep.subr.mxu0 0.0
    %1093 = vmatpush2.msra.mxu0 0.0
    %1094 = vmatprep.subr.mxu0 0.0
    %1095 = vmatpush2.msra.mxu0 0.0
    %1096 = vmatprep.subr.mxu0 0.0
    %1097 = vmatpush2.msra.mxu0 0.0
    %1098 = vmatprep.subr.mxu0 0.0
    %1099 = vmatpush2.msra.mxu0 0.0
    %1100 = vmatprep.subr.mxu0 0.0
    %1101 = vmatpush2.msra.mxu0 0.0
    %1102 = vmatprep.subr.mxu0 0.0
    %1103 = vmatpush2.msra.mxu0 0.0
    %1104 = vmatprep.subr.mxu0 0.0
    %1105 = vmatpush2.msra.mxu0 0.0
    %1106 = vmatprep.subr.mxu0 0.0
    %1107 = vmatpush2.msra.mxu0 0.0
    %1108 = vmatprep.mubr.f32.mxu0 0.0
    %1109 = vmatmul.mubr.f32.gmra.mxu0 %v1042
    %v1110 = vpop.f32.mrf.mxu0
    %v1111 = vadd.f32 %v431, %v1110
    %v1112 = vpop.f32.mrf.mxu0
    %1113 = vdwg.mxu0
    %v1114 = vadd.f32 %v347, %v1111
    %v1115 = vxor.u32 %v1114, 2147483648
    %v1116 = vmul.f32 %v1115, 1.442695
    %v1117 = vpow.pop %v1116
    %v1118 = vadd.f32 %v1117, 1.0
    %v1119 = vrcp.pop %v1118
    %v1120 = vmul.f32 1.0, %v1119
    %1122 = vrot.lane.b32.xlu0 %v1111, 64
    %v1123 = vpop.permute.xlu0 %1122
    %v1125 = vmul.f32 %v1120, %v1123
    %1127 = vrot.lane.b32.xlu0 %v1125, 64
    %v1128 = vpop.permute.xlu0 %1127
    %v1130 = vadd.f32 %v347, %v1128
    %v1131 = vtanh.pop %v1130
    %v1132 = vsub.f32 1.0, %v1120
    %1134 = vrot.lane.b32.xlu0 %v1131, 96
    %v1135 = vpop.permute.xlu0 %1134
    %v1137 = vmul.f32 %v1132, %v1135
    %v1138 = vmul.f32 %v1120, %v1038
    %v1139 = vadd.f32 %v1137, %v1138
    %s1140 = scalar_lea.vmem %s3, 64
    %v1141 = vld [vmem:[%s1140] sm:$0xff]
    %v1142 = vld [vmem:[%s1140 + $0x8] sm:$0xff]
    %v1143 = vld [vmem:[%s1140 + $0x10] sm:$0xff]
    %v1144 = vld [vmem:[%s1140 + $0x18] sm:$0xff]
    %v1145 = vld [vmem:[%s1140 + $0x20] sm:$0xff]
    %v1146 = vld [vmem:[%s1140 + $0x28] sm:$0xff]
    %v1147 = vld [vmem:[%s1140 + $0x30] sm:$0xff]
    %v1148 = vld [vmem:[%s1140 + $0x38] sm:$0xff]
    %s1149 = scalar_lea.vmem %s5, 2
    %v1150 = vld [vmem:[%s1149] sm:$0x3]
    %s1151 = scalar_lea.vmem %s4, 16
    %v1152 = vld [vmem:[%s1151] sm:$0xff]
    %v1153 = vld [vmem:[%s1151 + $0x8] sm:$0x1]
    %v1154 = vlaneseq
    %v1155 = vshrl.u32 %v1154, 7
    %v1156 = vsub.s32 0, %v1155
    %v1157 = vrot.slane %v1150, %v1156
    %1159 = vrot.lane.b32.xlu0 %v1139, 96
    %v1160 = vpop.permute.xlu0 %1159
    %v1161 = vsel %vm91, %v1160, 0
    %1163 = vmatprep.subr.mxu0 0.0
    %1164 = vmatpush1.msra.mxu0 0.0
    %1165 = vmatprep.subr.mxu0 0.0
    %1166 = vmatpush1.msra.mxu0 0.0
    %1167 = vmatprep.subr.mxu0 0.0
    %1168 = vmatpush1.msra.mxu0 0.0
    %1169 = vmatprep.subr.mxu0 0.0
    %1170 = vmatpush1.msra.mxu0 0.0
    %1171 = vmatprep.subr.mxu0 0.0
    %1172 = vmatpush1.msra.mxu0 0.0
    %1173 = vmatprep.subr.mxu0 0.0
    %1174 = vmatpush1.msra.mxu0 0.0
    %1175 = vmatprep.subr.mxu0 0.0
    %1176 = vmatpush1.msra.mxu0 0.0
    %1177 = vmatprep.subr.mxu0 0.0
    %1178 = vmatpush1.msra.mxu0 0.0
    %1179 = vmatprep.subr.mxu0 0.0
    %1180 = vmatpush1.msra.mxu0 0.0
    %1181 = vmatprep.subr.mxu0 0.0
    %1182 = vmatpush1.msra.mxu0 0.0
    %1183 = vmatprep.subr.mxu0 0.0
    %1184 = vmatpush1.msra.mxu0 0.0
    %1185 = vmatprep.subr.mxu0 0.0
    %1186 = vmatpush1.msra.mxu0 0.0
    %1187 = vmatprep.subr.mxu0 0.0
    %1188 = vmatpush1.msra.mxu0 %v1147
    %1189 = vmatprep.subr.mxu0 0.0
    %1190 = vmatpush1.msra.mxu0 %v1145
    %1191 = vmatprep.subr.mxu0 0.0
    %1192 = vmatpush1.msra.mxu0 %v1143
    %1193 = vmatprep.subr.mxu0 0.0
    %1194 = vmatpush1.msra.mxu0 %v1141
    %1195 = vmatprep.subr.mxu0 0.0
    %1196 = vmatpush2.msra.mxu0 0.0
    %1197 = vmatprep.subr.mxu0 0.0
    %1198 = vmatpush2.msra.mxu0 0.0
    %1199 = vmatprep.subr.mxu0 0.0
    %1200 = vmatpush2.msra.mxu0 0.0
    %1201 = vmatprep.subr.mxu0 0.0
    %1202 = vmatpush2.msra.mxu0 0.0
    %1203 = vmatprep.subr.mxu0 0.0
    %1204 = vmatpush2.msra.mxu0 0.0
    %1205 = vmatprep.subr.mxu0 0.0
    %1206 = vmatpush2.msra.mxu0 0.0
    %1207 = vmatprep.subr.mxu0 0.0
    %1208 = vmatpush2.msra.mxu0 0.0
    %1209 = vmatprep.subr.mxu0 0.0
    %1210 = vmatpush2.msra.mxu0 0.0
    %1211 = vmatprep.subr.mxu0 0.0
    %1212 = vmatpush2.msra.mxu0 0.0
    %1213 = vmatprep.subr.mxu0 0.0
    %1214 = vmatpush2.msra.mxu0 0.0
    %1215 = vmatprep.subr.mxu0 0.0
    %1216 = vmatpush2.msra.mxu0 0.0
    %1217 = vmatprep.subr.mxu0 0.0
    %1218 = vmatpush2.msra.mxu0 0.0
    %1219 = vmatprep.subr.mxu0 0.0
    %1220 = vmatpush2.msra.mxu0 0.0
    %1221 = vmatprep.subr.mxu0 0.0
    %1222 = vmatpush2.msra.mxu0 0.0
    %1223 = vmatprep.subr.mxu0 0.0
    %1224 = vmatpush2.msra.mxu0 0.0
    %1225 = vmatprep.subr.mxu0 0.0
    %1226 = vmatpush2.msra.mxu0 0.0
    %1227 = vmatprep.mubr.f32.mxu0 0.0
    %1228 = vmatmul.mubr.f32.gmra.mxu0 %v537
    %v1229 = vpop.f32.mrf.mxu0
    %v1230 = vadd.f32 %v1157, %v1229
    %v1231 = vpop.f32.mrf.mxu0
    %1232 = vmatprep.mubr.f32.mxu0 0.0
    %1233 = vmatmul.mubr.f32.gmra.mxu0 %v638
    %v1234 = vpop.f32.mrf.mxu0
    %v1235 = vadd.f32 %v1157, %v1234
    %v1236 = vpop.f32.mrf.mxu0
    %1237 = vmatprep.mubr.f32.mxu0 0.0
    %1238 = vmatmul.mubr.f32.gmra.mxu0 %v739
    %v1239 = vpop.f32.mrf.mxu0
    %v1240 = vadd.f32 %v1157, %v1239
    %v1241 = vpop.f32.mrf.mxu0
    %1242 = vmatprep.mubr.f32.mxu0 0.0
    %1243 = vmatmul.mubr.f32.gmra.mxu0 %v840
    %v1244 = vpop.f32.mrf.mxu0
    %v1245 = vadd.f32 %v1157, %v1244
    %v1246 = vpop.f32.mrf.mxu0
    %1247 = vmatprep.mubr.f32.mxu0 0.0
    %1248 = vmatmul.mubr.f32.gmra.mxu0 %v941
    %v1249 = vpop.f32.mrf.mxu0
    %v1250 = vadd.f32 %v1157, %v1249
    %v1251 = vpop.f32.mrf.mxu0
    %1252 = vmatprep.mubr.f32.mxu0 0.0
    %1253 = vmatmul.mubr.f32.gmra.mxu0 %v1042
    %v1254 = vpop.f32.mrf.mxu0
    %v1255 = vadd.f32 %v1157, %v1254
    %v1256 = vpop.f32.mrf.mxu0
    %1257 = vmatprep.mubr.f32.mxu0 0.0
    %1258 = vmatmul.mubr.f32.gmra.mxu0 %v1161
    %v1259 = vpop.f32.mrf.mxu0
    %v1260 = vadd.f32 %v1157, %v1259
    %v1261 = vpop.f32.mrf.mxu0
    %1262 = vdwg.mxu0
    %v1263 = vlaneseq
    %v1264 = vshrl.u32 %v1263, 7
    %v1265 = vsub.s32 0, %v1264
    %v1266 = vrot.slane %v1153, %v1265
    %1267 = vmatprep.subr.mxu0 0.0
    %1268 = vmatpush1.msra.mxu0 0.0
    %1269 = vmatprep.subr.mxu0 0.0
    %1270 = vmatpush1.msra.mxu0 0.0
    %1271 = vmatprep.subr.mxu0 0.0
    %1272 = vmatpush1.msra.mxu0 0.0
    %1273 = vmatprep.subr.mxu0 0.0
    %1274 = vmatpush1.msra.mxu0 0.0
    %1275 = vmatprep.subr.mxu0 0.0
    %1276 = vmatpush1.msra.mxu0 0.0
    %1277 = vmatprep.subr.mxu0 0.0
    %1278 = vmatpush1.msra.mxu0 0.0
    %1279 = vmatprep.subr.mxu0 0.0
    %1280 = vmatpush1.msra.mxu0 0.0
    %1281 = vmatprep.subr.mxu0 0.0
    %1282 = vmatpush1.msra.mxu0 0.0
    %1283 = vmatprep.subr.mxu0 0.0
    %1284 = vmatpush1.msra.mxu0 0.0
    %1285 = vmatprep.subr.mxu0 0.0
    %1286 = vmatpush1.msra.mxu0 0.0
    %1287 = vmatprep.subr.mxu0 0.0
    %1288 = vmatpush1.msra.mxu0 0.0
    %1289 = vmatprep.subr.mxu0 0.0
    %1290 = vmatpush1.msra.mxu0 0.0
    %1291 = vmatprep.subr.mxu0 0.0
    %1292 = vmatpush1.msra.mxu0 0.0
    %1293 = vmatprep.subr.mxu0 0.0
    %1294 = vmatpush1.msra.mxu0 0.0
    %1295 = vmatprep.subr.mxu0 0.0
    %1296 = vmatpush1.msra.mxu0 0.0
    %1297 = vmatprep.subr.mxu0 0.0
    %1298 = vmatpush1.msra.mxu0 %v1152
    %1299 = vmatprep.subr.mxu0 0.0
    %1300 = vmatpush2.msra.mxu0 0.0
    %1301 = vmatprep.subr.mxu0 0.0
    %1302 = vmatpush2.msra.mxu0 0.0
    %1303 = vmatprep.subr.mxu0 0.0
    %1304 = vmatpush2.msra.mxu0 0.0
    %1305 = vmatprep.subr.mxu0 0.0
    %1306 = vmatpush2.msra.mxu0 0.0
    %1307 = vmatprep.subr.mxu0 0.0
    %1308 = vmatpush2.msra.mxu0 0.0
    %1309 = vmatprep.subr.mxu0 0.0
    %1310 = vmatpush2.msra.mxu0 0.0
    %1311 = vmatprep.subr.mxu0 0.0
    %1312 = vmatpush2.msra.mxu0 0.0
    %1313 = vmatprep.subr.mxu0 0.0
    %1314 = vmatpush2.msra.mxu0 0.0
    %1315 = vmatprep.subr.mxu0 0.0
    %1316 = vmatpush2.msra.mxu0 0.0
    %1317 = vmatprep.subr.mxu0 0.0
    %1318 = vmatpush2.msra.mxu0 0.0
    %1319 = vmatprep.subr.mxu0 0.0
    %1320 = vmatpush2.msra.mxu0 0.0
    %1321 = vmatprep.subr.mxu0 0.0
    %1322 = vmatpush2.msra.mxu0 0.0
    %1323 = vmatprep.subr.mxu0 0.0
    %1324 = vmatpush2.msra.mxu0 0.0
    %1325 = vmatprep.subr.mxu0 0.0
    %1326 = vmatpush2.msra.mxu0 0.0
    %1327 = vmatprep.subr.mxu0 0.0
    %1328 = vmatpush2.msra.mxu0 0.0
    %1329 = vmatprep.subr.mxu0 0.0
    %1330 = vmatpush2.msra.mxu0 0.0
    %1331 = vmatprep.mubr.f32.mxu0 0.0
    %1332 = vmatmul.mubr.f32.gmra.mxu0 %v356
    %v1333 = vpop.f32.mrf.mxu0
    %v1334 = vadd.f32 %v1266, %v1333
    %v1335 = vpop.f32.mrf.mxu0
    %1336 = vdwg.mxu0
    %v1337 = vlaneseq
    %v1338 = vshrl.u32 %v1337, 7
    %v1339 = vsub.s32 1, %v1338
    %v1340 = vrot.slane %v1150, %v1339
    %v1342 = vsel %vm91, %v1334, 0
    %1344 = vmatprep.subr.mxu0 0.0
    %1345 = vmatpush1.msra.mxu0 0.0
    %1346 = vmatprep.subr.mxu0 0.0
    %1347 = vmatpush1.msra.mxu0 0.0
    %1348 = vmatprep.subr.mxu0 0.0
    %1349 = vmatpush1.msra.mxu0 0.0
    %1350 = vmatprep.subr.mxu0 0.0
    %1351 = vmatpush1.msra.mxu0 0.0
    %1352 = vmatprep.subr.mxu0 0.0
    %1353 = vmatpush1.msra.mxu0 0.0
    %1354 = vmatprep.subr.mxu0 0.0
    %1355 = vmatpush1.msra.mxu0 0.0
    %1356 = vmatprep.subr.mxu0 0.0
    %1357 = vmatpush1.msra.mxu0 0.0
    %1358 = vmatprep.subr.mxu0 0.0
    %1359 = vmatpush1.msra.mxu0 0.0
    %1360 = vmatprep.subr.mxu0 0.0
    %1361 = vmatpush1.msra.mxu0 0.0
    %1362 = vmatprep.subr.mxu0 0.0
    %1363 = vmatpush1.msra.mxu0 0.0
    %1364 = vmatprep.subr.mxu0 0.0
    %1365 = vmatpush1.msra.mxu0 0.0
    %1366 = vmatprep.subr.mxu0 0.0
    %1367 = vmatpush1.msra.mxu0 0.0
    %1368 = vmatprep.subr.mxu0 0.0
    %1369 = vmatpush1.msra.mxu0 %v1148
    %1370 = vmatprep.subr.mxu0 0.0
    %1371 = vmatpush1.msra.mxu0 %v1146
    %1372 = vmatprep.subr.mxu0 0.0
    %1373 = vmatpush1.msra.mxu0 %v1144
    %1374 = vmatprep.subr.mxu0 0.0
    %1375 = vmatpush1.msra.mxu0 %v1142
    %1376 = vmatprep.subr.mxu0 0.0
    %1377 = vmatpush2.msra.mxu0 0.0
    %1378 = vmatprep.subr.mxu0 0.0
    %1379 = vmatpush2.msra.mxu0 0.0
    %1380 = vmatprep.subr.mxu0 0.0
    %1381 = vmatpush2.msra.mxu0 0.0
    %1382 = vmatprep.subr.mxu0 0.0
    %1383 = vmatpush2.msra.mxu0 0.0
    %1384 = vmatprep.subr.mxu0 0.0
    %1385 = vmatpush2.msra.mxu0 0.0
    %1386 = vmatprep.subr.mxu0 0.0
    %1387 = vmatpush2.msra.mxu0 0.0
    %1388 = vmatprep.subr.mxu0 0.0
    %1389 = vmatpush2.msra.mxu0 0.0
    %1390 = vmatprep.subr.mxu0 0.0
    %1391 = vmatpush2.msra.mxu0 0.0
    %1392 = vmatprep.subr.mxu0 0.0
    %1393 = vmatpush2.msra.mxu0 0.0
    %1394 = vmatprep.subr.mxu0 0.0
    %1395 = vmatpush2.msra.mxu0 0.0
    %1396 = vmatprep.subr.mxu0 0.0
    %1397 = vmatpush2.msra.mxu0 0.0
    %1398 = vmatprep.subr.mxu0 0.0
    %1399 = vmatpush2.msra.mxu0 0.0
    %1400 = vmatprep.subr.mxu0 0.0
    %1401 = vmatpush2.msra.mxu0 0.0
    %1402 = vmatprep.subr.mxu0 0.0
    %1403 = vmatpush2.msra.mxu0 0.0
    %1404 = vmatprep.subr.mxu0 0.0
    %1405 = vmatpush2.msra.mxu0 0.0
    %1406 = vmatprep.subr.mxu0 0.0
    %1407 = vmatpush2.msra.mxu0 0.0
    %1408 = vmatprep.mubr.f32.mxu0 0.0
    %1409 = vmatmul.mubr.f32.gmra.mxu0 %v1342
    %v1410 = vpop.f32.mrf.mxu0
    %v1411 = vadd.f32 %v1340, %v1410
    %v1412 = vpop.f32.mrf.mxu0
    %1413 = vdwg.mxu0
    %v1414 = vadd.f32 %v1230, %v1411
    %v1415 = vxor.u32 %v1414, 2147483648
    %v1416 = vmul.f32 %v1415, 1.442695
    %v1417 = vpow.pop %v1416
    %v1418 = vadd.f32 %v1417, 1.0
    %v1419 = vrcp.pop %v1418
    %v1420 = vmul.f32 1.0, %v1419
    %1422 = vrot.lane.b32.xlu0 %v1411, 64
    %v1423 = vpop.permute.xlu0 %1422
    %v1425 = vmul.f32 %v1420, %v1423
    %1427 = vrot.lane.b32.xlu0 %v1425, 64
    %v1428 = vpop.permute.xlu0 %1427
    %v1430 = vadd.f32 %v1230, %v1428
    %v1431 = vtanh.pop %v1430
    %v1432 = vsub.f32 1.0, %v1420
    %1434 = vrot.lane.b32.xlu0 %v1431, 96
    %v1435 = vpop.permute.xlu0 %1434
    %v1437 = vmul.f32 %v1432, %v1435
    %1438 = vrot.lane.b32.xlu0 %v1334, 32
    %v1439 = vpop.permute.xlu0 %1438
    %v1441 = vmul.f32 %v1420, %v1439
    %v1442 = vadd.f32 %v1437, %v1441
    %1444 = vrot.lane.b32.xlu0 %v1442, 96
    %v1445 = vpop.permute.xlu0 %1444
    %v1446 = vsel %vm91, %v1445, 0
    %1448 = vmatprep.subr.mxu0 0.0
    %1449 = vmatpush1.msra.mxu0 0.0
    %1450 = vmatprep.subr.mxu0 0.0
    %1451 = vmatpush1.msra.mxu0 0.0
    %1452 = vmatprep.subr.mxu0 0.0
    %1453 = vmatpush1.msra.mxu0 0.0
    %1454 = vmatprep.subr.mxu0 0.0
    %1455 = vmatpush1.msra.mxu0 0.0
    %1456 = vmatprep.subr.mxu0 0.0
    %1457 = vmatpush1.msra.mxu0 0.0
    %1458 = vmatprep.subr.mxu0 0.0
    %1459 = vmatpush1.msra.mxu0 0.0
    %1460 = vmatprep.subr.mxu0 0.0
    %1461 = vmatpush1.msra.mxu0 0.0
    %1462 = vmatprep.subr.mxu0 0.0
    %1463 = vmatpush1.msra.mxu0 0.0
    %1464 = vmatprep.subr.mxu0 0.0
    %1465 = vmatpush1.msra.mxu0 0.0
    %1466 = vmatprep.subr.mxu0 0.0
    %1467 = vmatpush1.msra.mxu0 0.0
    %1468 = vmatprep.subr.mxu0 0.0
    %1469 = vmatpush1.msra.mxu0 0.0
    %1470 = vmatprep.subr.mxu0 0.0
    %1471 = vmatpush1.msra.mxu0 0.0
    %1472 = vmatprep.subr.mxu0 0.0
    %1473 = vmatpush1.msra.mxu0 %v1148
    %1474 = vmatprep.subr.mxu0 0.0
    %1475 = vmatpush1.msra.mxu0 %v1146
    %1476 = vmatprep.subr.mxu0 0.0
    %1477 = vmatpush1.msra.mxu0 %v1144
    %1478 = vmatprep.subr.mxu0 0.0
    %1479 = vmatpush1.msra.mxu0 %v1142
    %1480 = vmatprep.subr.mxu0 0.0
    %1481 = vmatpush2.msra.mxu0 0.0
    %1482 = vmatprep.subr.mxu0 0.0
    %1483 = vmatpush2.msra.mxu0 0.0
    %1484 = vmatprep.subr.mxu0 0.0
    %1485 = vmatpush2.msra.mxu0 0.0
    %1486 = vmatprep.subr.mxu0 0.0
    %1487 = vmatpush2.msra.mxu0 0.0
    %1488 = vmatprep.subr.mxu0 0.0
    %1489 = vmatpush2.msra.mxu0 0.0
    %1490 = vmatprep.subr.mxu0 0.0
    %1491 = vmatpush2.msra.mxu0 0.0
    %1492 = vmatprep.subr.mxu0 0.0
    %1493 = vmatpush2.msra.mxu0 0.0
    %1494 = vmatprep.subr.mxu0 0.0
    %1495 = vmatpush2.msra.mxu0 0.0
    %1496 = vmatprep.subr.mxu0 0.0
    %1497 = vmatpush2.msra.mxu0 0.0
    %1498 = vmatprep.subr.mxu0 0.0
    %1499 = vmatpush2.msra.mxu0 0.0
    %1500 = vmatprep.subr.mxu0 0.0
    %1501 = vmatpush2.msra.mxu0 0.0
    %1502 = vmatprep.subr.mxu0 0.0
    %1503 = vmatpush2.msra.mxu0 0.0
    %1504 = vmatprep.subr.mxu0 0.0
    %1505 = vmatpush2.msra.mxu0 0.0
    %1506 = vmatprep.subr.mxu0 0.0
    %1507 = vmatpush2.msra.mxu0 0.0
    %1508 = vmatprep.subr.mxu0 0.0
    %1509 = vmatpush2.msra.mxu0 0.0
    %1510 = vmatprep.subr.mxu0 0.0
    %1511 = vmatpush2.msra.mxu0 0.0
    %1512 = vmatprep.mubr.f32.mxu0 0.0
    %1513 = vmatmul.mubr.f32.gmra.mxu0 %v1446
    %v1514 = vpop.f32.mrf.mxu0
    %v1515 = vadd.f32 %v1340, %v1514
    %v1516 = vpop.f32.mrf.mxu0
    %1517 = vdwg.mxu0
    %v1518 = vadd.f32 %v1235, %v1515
    %v1519 = vxor.u32 %v1518, 2147483648
    %v1520 = vmul.f32 %v1519, 1.442695
    %v1521 = vpow.pop %v1520
    %v1522 = vadd.f32 %v1521, 1.0
    %v1523 = vrcp.pop %v1522
    %v1524 = vmul.f32 1.0, %v1523
    %1526 = vrot.lane.b32.xlu0 %v1515, 64
    %v1527 = vpop.permute.xlu0 %1526
    %v1529 = vmul.f32 %v1524, %v1527
    %1531 = vrot.lane.b32.xlu0 %v1529, 64
    %v1532 = vpop.permute.xlu0 %1531
    %v1534 = vadd.f32 %v1235, %v1532
    %v1535 = vtanh.pop %v1534
    %v1536 = vsub.f32 1.0, %v1524
    %1538 = vrot.lane.b32.xlu0 %v1535, 96
    %v1539 = vpop.permute.xlu0 %1538
    %v1541 = vmul.f32 %v1536, %v1539
    %v1542 = vmul.f32 %v1524, %v1442
    %v1543 = vadd.f32 %v1541, %v1542
    %1545 = vrot.lane.b32.xlu0 %v1543, 96
    %v1546 = vpop.permute.xlu0 %1545
    %v1547 = vsel %vm91, %v1546, 0
    %1549 = vmatprep.subr.mxu0 0.0
    %1550 = vmatpush1.msra.mxu0 0.0
    %1551 = vmatprep.subr.mxu0 0.0
    %1552 = vmatpush1.msra.mxu0 0.0
    %1553 = vmatprep.subr.mxu0 0.0
    %1554 = vmatpush1.msra.mxu0 0.0
    %1555 = vmatprep.subr.mxu0 0.0
    %1556 = vmatpush1.msra.mxu0 0.0
    %1557 = vmatprep.subr.mxu0 0.0
    %1558 = vmatpush1.msra.mxu0 0.0
    %1559 = vmatprep.subr.mxu0 0.0
    %1560 = vmatpush1.msra.mxu0 0.0
    %1561 = vmatprep.subr.mxu0 0.0
    %1562 = vmatpush1.msra.mxu0 0.0
    %1563 = vmatprep.subr.mxu0 0.0
    %1564 = vmatpush1.msra.mxu0 0.0
    %1565 = vmatprep.subr.mxu0 0.0
    %1566 = vmatpush1.msra.mxu0 0.0
    %1567 = vmatprep.subr.mxu0 0.0
    %1568 = vmatpush1.msra.mxu0 0.0
    %1569 = vmatprep.subr.mxu0 0.0
    %1570 = vmatpush1.msra.mxu0 0.0
    %1571 = vmatprep.subr.mxu0 0.0
    %1572 = vmatpush1.msra.mxu0 0.0
    %1573 = vmatprep.subr.mxu0 0.0
    %1574 = vmatpush1.msra.mxu0 %v1148
    %1575 = vmatprep.subr.mxu0 0.0
    %1576 = vmatpush1.msra.mxu0 %v1146
    %1577 = vmatprep.subr.mxu0 0.0
    %1578 = vmatpush1.msra.mxu0 %v1144
    %1579 = vmatprep.subr.mxu0 0.0
    %1580 = vmatpush1.msra.mxu0 %v1142
    %1581 = vmatprep.subr.mxu0 0.0
    %1582 = vmatpush2.msra.mxu0 0.0
    %1583 = vmatprep.subr.mxu0 0.0
    %1584 = vmatpush2.msra.mxu0 0.0
    %1585 = vmatprep.subr.mxu0 0.0
    %1586 = vmatpush2.msra.mxu0 0.0
    %1587 = vmatprep.subr.mxu0 0.0
    %1588 = vmatpush2.msra.mxu0 0.0
    %1589 = vmatprep.subr.mxu0 0.0
    %1590 = vmatpush2.msra.mxu0 0.0
    %1591 = vmatprep.subr.mxu0 0.0
    %1592 = vmatpush2.msra.mxu0 0.0
    %1593 = vmatprep.subr.mxu0 0.0
    %1594 = vmatpush2.msra.mxu0 0.0
    %1595 = vmatprep.subr.mxu0 0.0
    %1596 = vmatpush2.msra.mxu0 0.0
    %1597 = vmatprep.subr.mxu0 0.0
    %1598 = vmatpush2.msra.mxu0 0.0
    %1599 = vmatprep.subr.mxu0 0.0
    %1600 = vmatpush2.msra.mxu0 0.0
    %1601 = vmatprep.subr.mxu0 0.0
    %1602 = vmatpush2.msra.mxu0 0.0
    %1603 = vmatprep.subr.mxu0 0.0
    %1604 = vmatpush2.msra.mxu0 0.0
    %1605 = vmatprep.subr.mxu0 0.0
    %1606 = vmatpush2.msra.mxu0 0.0
    %1607 = vmatprep.subr.mxu0 0.0
    %1608 = vmatpush2.msra.mxu0 0.0
    %1609 = vmatprep.subr.mxu0 0.0
    %1610 = vmatpush2.msra.mxu0 0.0
    %1611 = vmatprep.subr.mxu0 0.0
    %1612 = vmatpush2.msra.mxu0 0.0
    %1613 = vmatprep.mubr.f32.mxu0 0.0
    %1614 = vmatmul.mubr.f32.gmra.mxu0 %v1547
    %v1615 = vpop.f32.mrf.mxu0
    %v1616 = vadd.f32 %v1340, %v1615
    %v1617 = vpop.f32.mrf.mxu0
    %1618 = vdwg.mxu0
    %v1619 = vadd.f32 %v1240, %v1616
    %v1620 = vxor.u32 %v1619, 2147483648
    %v1621 = vmul.f32 %v1620, 1.442695
    %v1622 = vpow.pop %v1621
    %v1623 = vadd.f32 %v1622, 1.0
    %v1624 = vrcp.pop %v1623
    %v1625 = vmul.f32 1.0, %v1624
    %1627 = vrot.lane.b32.xlu0 %v1616, 64
    %v1628 = vpop.permute.xlu0 %1627
    %v1630 = vmul.f32 %v1625, %v1628
    %1632 = vrot.lane.b32.xlu0 %v1630, 64
    %v1633 = vpop.permute.xlu0 %1632
    %v1635 = vadd.f32 %v1240, %v1633
    %v1636 = vtanh.pop %v1635
    %v1637 = vsub.f32 1.0, %v1625
    %1639 = vrot.lane.b32.xlu0 %v1636, 96
    %v1640 = vpop.permute.xlu0 %1639
    %v1642 = vmul.f32 %v1637, %v1640
    %v1643 = vmul.f32 %v1625, %v1543
    %v1644 = vadd.f32 %v1642, %v1643
    %1646 = vrot.lane.b32.xlu0 %v1644, 96
    %v1647 = vpop.permute.xlu0 %1646
    %v1648 = vsel %vm91, %v1647, 0
    %1650 = vmatprep.subr.mxu0 0.0
    %1651 = vmatpush1.msra.mxu0 0.0
    %1652 = vmatprep.subr.mxu0 0.0
    %1653 = vmatpush1.msra.mxu0 0.0
    %1654 = vmatprep.subr.mxu0 0.0
    %1655 = vmatpush1.msra.mxu0 0.0
    %1656 = vmatprep.subr.mxu0 0.0
    %1657 = vmatpush1.msra.mxu0 0.0
    %1658 = vmatprep.subr.mxu0 0.0
    %1659 = vmatpush1.msra.mxu0 0.0
    %1660 = vmatprep.subr.mxu0 0.0
    %1661 = vmatpush1.msra.mxu0 0.0
    %1662 = vmatprep.subr.mxu0 0.0
    %1663 = vmatpush1.msra.mxu0 0.0
    %1664 = vmatprep.subr.mxu0 0.0
    %1665 = vmatpush1.msra.mxu0 0.0
    %1666 = vmatprep.subr.mxu0 0.0
    %1667 = vmatpush1.msra.mxu0 0.0
    %1668 = vmatprep.subr.mxu0 0.0
    %1669 = vmatpush1.msra.mxu0 0.0
    %1670 = vmatprep.subr.mxu0 0.0
    %1671 = vmatpush1.msra.mxu0 0.0
    %1672 = vmatprep.subr.mxu0 0.0
    %1673 = vmatpush1.msra.mxu0 0.0
    %1674 = vmatprep.subr.mxu0 0.0
    %1675 = vmatpush1.msra.mxu0 %v1148
    %1676 = vmatprep.subr.mxu0 0.0
    %1677 = vmatpush1.msra.mxu0 %v1146
    %1678 = vmatprep.subr.mxu0 0.0
    %1679 = vmatpush1.msra.mxu0 %v1144
    %1680 = vmatprep.subr.mxu0 0.0
    %1681 = vmatpush1.msra.mxu0 %v1142
    %1682 = vmatprep.subr.mxu0 0.0
    %1683 = vmatpush2.msra.mxu0 0.0
    %1684 = vmatprep.subr.mxu0 0.0
    %1685 = vmatpush2.msra.mxu0 0.0
    %1686 = vmatprep.subr.mxu0 0.0
    %1687 = vmatpush2.msra.mxu0 0.0
    %1688 = vmatprep.subr.mxu0 0.0
    %1689 = vmatpush2.msra.mxu0 0.0
    %1690 = vmatprep.subr.mxu0 0.0
    %1691 = vmatpush2.msra.mxu0 0.0
    %1692 = vmatprep.subr.mxu0 0.0
    %1693 = vmatpush2.msra.mxu0 0.0
    %1694 = vmatprep.subr.mxu0 0.0
    %1695 = vmatpush2.msra.mxu0 0.0
    %1696 = vmatprep.subr.mxu0 0.0
    %1697 = vmatpush2.msra.mxu0 0.0
    %1698 = vmatprep.subr.mxu0 0.0
    %1699 = vmatpush2.msra.mxu0 0.0
    %1700 = vmatprep.subr.mxu0 0.0
    %1701 = vmatpush2.msra.mxu0 0.0
    %1702 = vmatprep.subr.mxu0 0.0
    %1703 = vmatpush2.msra.mxu0 0.0
    %1704 = vmatprep.subr.mxu0 0.0
    %1705 = vmatpush2.msra.mxu0 0.0
    %1706 = vmatprep.subr.mxu0 0.0
    %1707 = vmatpush2.msra.mxu0 0.0
    %1708 = vmatprep.subr.mxu0 0.0
    %1709 = vmatpush2.msra.mxu0 0.0
    %1710 = vmatprep.subr.mxu0 0.0
    %1711 = vmatpush2.msra.mxu0 0.0
    %1712 = vmatprep.subr.mxu0 0.0
    %1713 = vmatpush2.msra.mxu0 0.0
    %1714 = vmatprep.mubr.f32.mxu0 0.0
    %1715 = vmatmul.mubr.f32.gmra.mxu0 %v1648
    %v1716 = vpop.f32.mrf.mxu0
    %v1717 = vadd.f32 %v1340, %v1716
    %v1718 = vpop.f32.mrf.mxu0
    %1719 = vdwg.mxu0
    %v1720 = vadd.f32 %v1245, %v1717
    %v1721 = vxor.u32 %v1720, 2147483648
    %v1722 = vmul.f32 %v1721, 1.442695
    %v1723 = vpow.pop %v1722
    %v1724 = vadd.f32 %v1723, 1.0
    %v1725 = vrcp.pop %v1724
    %v1726 = vmul.f32 1.0, %v1725
    %1728 = vrot.lane.b32.xlu0 %v1717, 64
    %v1729 = vpop.permute.xlu0 %1728
    %v1731 = vmul.f32 %v1726, %v1729
    %1733 = vrot.lane.b32.xlu0 %v1731, 64
    %v1734 = vpop.permute.xlu0 %1733
    %v1736 = vadd.f32 %v1245, %v1734
    %v1737 = vtanh.pop %v1736
    %v1738 = vsub.f32 1.0, %v1726
    %1740 = vrot.lane.b32.xlu0 %v1737, 96
    %v1741 = vpop.permute.xlu0 %1740
    %v1743 = vmul.f32 %v1738, %v1741
    %v1744 = vmul.f32 %v1726, %v1644
    %v1745 = vadd.f32 %v1743, %v1744
    %1747 = vrot.lane.b32.xlu0 %v1745, 96
    %v1748 = vpop.permute.xlu0 %1747
    %v1749 = vsel %vm91, %v1748, 0
    %1751 = vmatprep.subr.mxu0 0.0
    %1752 = vmatpush1.msra.mxu0 0.0
    %1753 = vmatprep.subr.mxu0 0.0
    %1754 = vmatpush1.msra.mxu0 0.0
    %1755 = vmatprep.subr.mxu0 0.0
    %1756 = vmatpush1.msra.mxu0 0.0
    %1757 = vmatprep.subr.mxu0 0.0
    %1758 = vmatpush1.msra.mxu0 0.0
    %1759 = vmatprep.subr.mxu0 0.0
    %1760 = vmatpush1.msra.mxu0 0.0
    %1761 = vmatprep.subr.mxu0 0.0
    %1762 = vmatpush1.msra.mxu0 0.0
    %1763 = vmatprep.subr.mxu0 0.0
    %1764 = vmatpush1.msra.mxu0 0.0
    %1765 = vmatprep.subr.mxu0 0.0
    %1766 = vmatpush1.msra.mxu0 0.0
    %1767 = vmatprep.subr.mxu0 0.0
    %1768 = vmatpush1.msra.mxu0 0.0
    %1769 = vmatprep.subr.mxu0 0.0
    %1770 = vmatpush1.msra.mxu0 0.0
    %1771 = vmatprep.subr.mxu0 0.0
    %1772 = vmatpush1.msra.mxu0 0.0
    %1773 = vmatprep.subr.mxu0 0.0
    %1774 = vmatpush1.msra.mxu0 0.0
    %1775 = vmatprep.subr.mxu0 0.0
    %1776 = vmatpush1.msra.mxu0 %v1148
    %1777 = vmatprep.subr.mxu0 0.0
    %1778 = vmatpush1.msra.mxu0 %v1146
    %1779 = vmatprep.subr.mxu0 0.0
    %1780 = vmatpush1.msra.mxu0 %v1144
    %1781 = vmatprep.subr.mxu0 0.0
    %1782 = vmatpush1.msra.mxu0 %v1142
    %1783 = vmatprep.subr.mxu0 0.0
    %1784 = vmatpush2.msra.mxu0 0.0
    %1785 = vmatprep.subr.mxu0 0.0
    %1786 = vmatpush2.msra.mxu0 0.0
    %1787 = vmatprep.subr.mxu0 0.0
    %1788 = vmatpush2.msra.mxu0 0.0
    %1789 = vmatprep.subr.mxu0 0.0
    %1790 = vmatpush2.msra.mxu0 0.0
    %1791 = vmatprep.subr.mxu0 0.0
    %1792 = vmatpush2.msra.mxu0 0.0
    %1793 = vmatprep.subr.mxu0 0.0
    %1794 = vmatpush2.msra.mxu0 0.0
    %1795 = vmatprep.subr.mxu0 0.0
    %1796 = vmatpush2.msra.mxu0 0.0
    %1797 = vmatprep.subr.mxu0 0.0
    %1798 = vmatpush2.msra.mxu0 0.0
    %1799 = vmatprep.subr.mxu0 0.0
    %1800 = vmatpush2.msra.mxu0 0.0
    %1801 = vmatprep.subr.mxu0 0.0
    %1802 = vmatpush2.msra.mxu0 0.0
    %1803 = vmatprep.subr.mxu0 0.0
    %1804 = vmatpush2.msra.mxu0 0.0
    %1805 = vmatprep.subr.mxu0 0.0
    %1806 = vmatpush2.msra.mxu0 0.0
    %1807 = vmatprep.subr.mxu0 0.0
    %1808 = vmatpush2.msra.mxu0 0.0
    %1809 = vmatprep.subr.mxu0 0.0
    %1810 = vmatpush2.msra.mxu0 0.0
    %1811 = vmatprep.subr.mxu0 0.0
    %1812 = vmatpush2.msra.mxu0 0.0
    %1813 = vmatprep.subr.mxu0 0.0
    %1814 = vmatpush2.msra.mxu0 0.0
    %1815 = vmatprep.mubr.f32.mxu0 0.0
    %1816 = vmatmul.mubr.f32.gmra.mxu0 %v1749
    %v1817 = vpop.f32.mrf.mxu0
    %v1818 = vadd.f32 %v1340, %v1817
    %v1819 = vpop.f32.mrf.mxu0
    %1820 = vdwg.mxu0
    %v1821 = vadd.f32 %v1250, %v1818
    %v1822 = vxor.u32 %v1821, 2147483648
    %v1823 = vmul.f32 %v1822, 1.442695
    %v1824 = vpow.pop %v1823
    %v1825 = vadd.f32 %v1824, 1.0
    %v1826 = vrcp.pop %v1825
    %v1827 = vmul.f32 1.0, %v1826
    %1829 = vrot.lane.b32.xlu0 %v1818, 64
    %v1830 = vpop.permute.xlu0 %1829
    %v1832 = vmul.f32 %v1827, %v1830
    %1834 = vrot.lane.b32.xlu0 %v1832, 64
    %v1835 = vpop.permute.xlu0 %1834
    %v1837 = vadd.f32 %v1250, %v1835
    %v1838 = vtanh.pop %v1837
    %v1839 = vsub.f32 1.0, %v1827
    %1841 = vrot.lane.b32.xlu0 %v1838, 96
    %v1842 = vpop.permute.xlu0 %1841
    %v1844 = vmul.f32 %v1839, %v1842
    %v1845 = vmul.f32 %v1827, %v1745
    %v1846 = vadd.f32 %v1844, %v1845
    %1848 = vrot.lane.b32.xlu0 %v1846, 96
    %v1849 = vpop.permute.xlu0 %1848
    %v1850 = vsel %vm91, %v1849, 0
    %1852 = vmatprep.subr.mxu0 0.0
    %1853 = vmatpush1.msra.mxu0 0.0
    %1854 = vmatprep.subr.mxu0 0.0
    %1855 = vmatpush1.msra.mxu0 0.0
    %1856 = vmatprep.subr.mxu0 0.0
    %1857 = vmatpush1.msra.mxu0 0.0
    %1858 = vmatprep.subr.mxu0 0.0
    %1859 = vmatpush1.msra.mxu0 0.0
    %1860 = vmatprep.subr.mxu0 0.0
    %1861 = vmatpush1.msra.mxu0 0.0
    %1862 = vmatprep.subr.mxu0 0.0
    %1863 = vmatpush1.msra.mxu0 0.0
    %1864 = vmatprep.subr.mxu0 0.0
    %1865 = vmatpush1.msra.mxu0 0.0
    %1866 = vmatprep.subr.mxu0 0.0
    %1867 = vmatpush1.msra.mxu0 0.0
    %1868 = vmatprep.subr.mxu0 0.0
    %1869 = vmatpush1.msra.mxu0 0.0
    %1870 = vmatprep.subr.mxu0 0.0
    %1871 = vmatpush1.msra.mxu0 0.0
    %1872 = vmatprep.subr.mxu0 0.0
    %1873 = vmatpush1.msra.mxu0 0.0
    %1874 = vmatprep.subr.mxu0 0.0
    %1875 = vmatpush1.msra.mxu0 0.0
    %1876 = vmatprep.subr.mxu0 0.0
    %1877 = vmatpush1.msra.mxu0 %v1148
    %1878 = vmatprep.subr.mxu0 0.0
    %1879 = vmatpush1.msra.mxu0 %v1146
    %1880 = vmatprep.subr.mxu0 0.0
    %1881 = vmatpush1.msra.mxu0 %v1144
    %1882 = vmatprep.subr.mxu0 0.0
    %1883 = vmatpush1.msra.mxu0 %v1142
    %1884 = vmatprep.subr.mxu0 0.0
    %1885 = vmatpush2.msra.mxu0 0.0
    %1886 = vmatprep.subr.mxu0 0.0
    %1887 = vmatpush2.msra.mxu0 0.0
    %1888 = vmatprep.subr.mxu0 0.0
    %1889 = vmatpush2.msra.mxu0 0.0
    %1890 = vmatprep.subr.mxu0 0.0
    %1891 = vmatpush2.msra.mxu0 0.0
    %1892 = vmatprep.subr.mxu0 0.0
    %1893 = vmatpush2.msra.mxu0 0.0
    %1894 = vmatprep.subr.mxu0 0.0
    %1895 = vmatpush2.msra.mxu0 0.0
    %1896 = vmatprep.subr.mxu0 0.0
    %1897 = vmatpush2.msra.mxu0 0.0
    %1898 = vmatprep.subr.mxu0 0.0
    %1899 = vmatpush2.msra.mxu0 0.0
    %1900 = vmatprep.subr.mxu0 0.0
    %1901 = vmatpush2.msra.mxu0 0.0
    %1902 = vmatprep.subr.mxu0 0.0
    %1903 = vmatpush2.msra.mxu0 0.0
    %1904 = vmatprep.subr.mxu0 0.0
    %1905 = vmatpush2.msra.mxu0 0.0
    %1906 = vmatprep.subr.mxu0 0.0
    %1907 = vmatpush2.msra.mxu0 0.0
    %1908 = vmatprep.subr.mxu0 0.0
    %1909 = vmatpush2.msra.mxu0 0.0
    %1910 = vmatprep.subr.mxu0 0.0
    %1911 = vmatpush2.msra.mxu0 0.0
    %1912 = vmatprep.subr.mxu0 0.0
    %1913 = vmatpush2.msra.mxu0 0.0
    %1914 = vmatprep.subr.mxu0 0.0
    %1915 = vmatpush2.msra.mxu0 0.0
    %1916 = vmatprep.mubr.f32.mxu0 0.0
    %1917 = vmatmul.mubr.f32.gmra.mxu0 %v1850
    %v1918 = vpop.f32.mrf.mxu0
    %v1919 = vadd.f32 %v1340, %v1918
    %v1920 = vpop.f32.mrf.mxu0
    %1921 = vdwg.mxu0
    %v1922 = vadd.f32 %v1255, %v1919
    %v1923 = vxor.u32 %v1922, 2147483648
    %v1924 = vmul.f32 %v1923, 1.442695
    %v1925 = vpow.pop %v1924
    %v1926 = vadd.f32 %v1925, 1.0
    %v1927 = vrcp.pop %v1926
    %v1928 = vmul.f32 1.0, %v1927
    %1930 = vrot.lane.b32.xlu0 %v1919, 64
    %v1931 = vpop.permute.xlu0 %1930
    %v1933 = vmul.f32 %v1928, %v1931
    %1935 = vrot.lane.b32.xlu0 %v1933, 64
    %v1936 = vpop.permute.xlu0 %1935
    %v1938 = vadd.f32 %v1255, %v1936
    %v1939 = vtanh.pop %v1938
    %v1940 = vsub.f32 1.0, %v1928
    %1942 = vrot.lane.b32.xlu0 %v1939, 96
    %v1943 = vpop.permute.xlu0 %1942
    %v1945 = vmul.f32 %v1940, %v1943
    %v1946 = vmul.f32 %v1928, %v1846
    %v1947 = vadd.f32 %v1945, %v1946
    %1949 = vrot.lane.b32.xlu0 %v1947, 96
    %v1950 = vpop.permute.xlu0 %1949
    %v1951 = vsel %vm91, %v1950, 0
    %1953 = vmatprep.subr.mxu0 0.0
    %1954 = vmatpush1.msra.mxu0 0.0
    %1955 = vmatprep.subr.mxu0 0.0
    %1956 = vmatpush1.msra.mxu0 0.0
    %1957 = vmatprep.subr.mxu0 0.0
    %1958 = vmatpush1.msra.mxu0 0.0
    %1959 = vmatprep.subr.mxu0 0.0
    %1960 = vmatpush1.msra.mxu0 0.0
    %1961 = vmatprep.subr.mxu0 0.0
    %1962 = vmatpush1.msra.mxu0 0.0
    %1963 = vmatprep.subr.mxu0 0.0
    %1964 = vmatpush1.msra.mxu0 0.0
    %1965 = vmatprep.subr.mxu0 0.0
    %1966 = vmatpush1.msra.mxu0 0.0
    %1967 = vmatprep.subr.mxu0 0.0
    %1968 = vmatpush1.msra.mxu0 0.0
    %1969 = vmatprep.subr.mxu0 0.0
    %1970 = vmatpush1.msra.mxu0 0.0
    %1971 = vmatprep.subr.mxu0 0.0
    %1972 = vmatpush1.msra.mxu0 0.0
    %1973 = vmatprep.subr.mxu0 0.0
    %1974 = vmatpush1.msra.mxu0 0.0
    %1975 = vmatprep.subr.mxu0 0.0
    %1976 = vmatpush1.msra.mxu0 0.0
    %1977 = vmatprep.subr.mxu0 0.0
    %1978 = vmatpush1.msra.mxu0 %v1148
    %1979 = vmatprep.subr.mxu0 0.0
    %1980 = vmatpush1.msra.mxu0 %v1146
    %1981 = vmatprep.subr.mxu0 0.0
    %1982 = vmatpush1.msra.mxu0 %v1144
    %1983 = vmatprep.subr.mxu0 0.0
    %1984 = vmatpush1.msra.mxu0 %v1142
    %1985 = vmatprep.subr.mxu0 0.0
    %1986 = vmatpush2.msra.mxu0 0.0
    %1987 = vmatprep.subr.mxu0 0.0
    %1988 = vmatpush2.msra.mxu0 0.0
    %1989 = vmatprep.subr.mxu0 0.0
    %1990 = vmatpush2.msra.mxu0 0.0
    %1991 = vmatprep.subr.mxu0 0.0
    %1992 = vmatpush2.msra.mxu0 0.0
    %1993 = vmatprep.subr.mxu0 0.0
    %1994 = vmatpush2.msra.mxu0 0.0
    %1995 = vmatprep.subr.mxu0 0.0
    %1996 = vmatpush2.msra.mxu0 0.0
    %1997 = vmatprep.subr.mxu0 0.0
    %1998 = vmatpush2.msra.mxu0 0.0
    %1999 = vmatprep.subr.mxu0 0.0
    %2000 = vmatpush2.msra.mxu0 0.0
    %2001 = vmatprep.subr.mxu0 0.0
    %2002 = vmatpush2.msra.mxu0 0.0
    %2003 = vmatprep.subr.mxu0 0.0
    %2004 = vmatpush2.msra.mxu0 0.0
    %2005 = vmatprep.subr.mxu0 0.0
    %2006 = vmatpush2.msra.mxu0 0.0
    %2007 = vmatprep.subr.mxu0 0.0
    %2008 = vmatpush2.msra.mxu0 0.0
    %2009 = vmatprep.subr.mxu0 0.0
    %2010 = vmatpush2.msra.mxu0 0.0
    %2011 = vmatprep.subr.mxu0 0.0
    %2012 = vmatpush2.msra.mxu0 0.0
    %2013 = vmatprep.subr.mxu0 0.0
    %2014 = vmatpush2.msra.mxu0 0.0
    %2015 = vmatprep.subr.mxu0 0.0
    %2016 = vmatpush2.msra.mxu0 0.0
    %2017 = vmatprep.mubr.f32.mxu0 0.0
    %2018 = vmatmul.mubr.f32.gmra.mxu0 %v1951
    %v2019 = vpop.f32.mrf.mxu0
    %v2020 = vadd.f32 %v1340, %v2019
    %v2021 = vpop.f32.mrf.mxu0
    %2022 = vdwg.mxu0
    %v2023 = vadd.f32 %v1260, %v2020
    %v2024 = vxor.u32 %v2023, 2147483648
    %v2025 = vmul.f32 %v2024, 1.442695
    %v2026 = vpow.pop %v2025
    %v2027 = vadd.f32 %v2026, 1.0
    %v2028 = vrcp.pop %v2027
    %v2029 = vmul.f32 1.0, %v2028
    %2031 = vrot.lane.b32.xlu0 %v2020, 64
    %v2032 = vpop.permute.xlu0 %2031
    %v2034 = vmul.f32 %v2029, %v2032
    %2036 = vrot.lane.b32.xlu0 %v2034, 64
    %v2037 = vpop.permute.xlu0 %2036
    %v2039 = vadd.f32 %v1260, %v2037
    %v2040 = vtanh.pop %v2039
    %v2041 = vsub.f32 1.0, %v2029
    %2043 = vrot.lane.b32.xlu0 %v2040, 96
    %v2044 = vpop.permute.xlu0 %2043
    %v2046 = vmul.f32 %v2041, %v2044
    %v2047 = vmul.f32 %v2029, %v1947
    %v2048 = vadd.f32 %v2046, %v2047
    %v2049 = vld [vmem:[#allocation2] sm:$0xff]
    %v2050 = vld [vmem:[#allocation2 + $0x8] sm:$0xff]
    %v2051 = vld [vmem:[#allocation2 + $0x10] sm:$0xff]
    %v2052 = vld [vmem:[#allocation2 + $0x18] sm:$0xff]
    %v2053 = vld [vmem:[%s7] sm:$0x1]
    %v2055 = vlaneseq
    %v2056 = vshrl.u32 %v2055, 7
    %v2057 = vsub.s32 0, %v2056
    %v2058 = vrot.slane %v2053, %v2057
    %2061 = vrot.lane.b32.xlu0 %v2048, 96
    %v2062 = vpop.permute.xlu0 %2061
    %v2063 = vsel %vm91, %v2062, 0
    %2065 = vmatprep.subr.mxu0 0.0
    %2066 = vmatpush1.msra.mxu0 0.0
    %2067 = vmatprep.subr.mxu0 0.0
    %2068 = vmatpush1.msra.mxu0 0.0
    %2069 = vmatprep.subr.mxu0 0.0
    %2070 = vmatpush1.msra.mxu0 0.0
    %2071 = vmatprep.subr.mxu0 0.0
    %2072 = vmatpush1.msra.mxu0 0.0
    %2073 = vmatprep.subr.mxu0 0.0
    %2074 = vmatpush1.msra.mxu0 0.0
    %2075 = vmatprep.subr.mxu0 0.0
    %2076 = vmatpush1.msra.mxu0 0.0
    %2077 = vmatprep.subr.mxu0 0.0
    %2078 = vmatpush1.msra.mxu0 0.0
    %2079 = vmatprep.subr.mxu0 0.0
    %2080 = vmatpush1.msra.mxu0 0.0
    %2081 = vmatprep.subr.mxu0 0.0
    %2082 = vmatpush1.msra.mxu0 0.0
    %2083 = vmatprep.subr.mxu0 0.0
    %2084 = vmatpush1.msra.mxu0 0.0
    %2085 = vmatprep.subr.mxu0 0.0
    %2086 = vmatpush1.msra.mxu0 0.0
    %2087 = vmatprep.subr.mxu0 0.0
    %2088 = vmatpush1.msra.mxu0 0.0
    %2089 = vmatprep.subr.mxu0 0.0
    %2090 = vmatpush1.msra.mxu0 %v2052
    %2091 = vmatprep.subr.mxu0 0.0
    %2092 = vmatpush1.msra.mxu0 %v2051
    %2093 = vmatprep.subr.mxu0 0.0
    %2094 = vmatpush1.msra.mxu0 %v2050
    %2095 = vmatprep.subr.mxu0 0.0
    %2096 = vmatpush1.msra.mxu0 %v2049
    %2097 = vmatprep.subr.mxu0 0.0
    %2098 = vmatpush2.msra.mxu0 0.0
    %2099 = vmatprep.subr.mxu0 0.0
    %2100 = vmatpush2.msra.mxu0 0.0
    %2101 = vmatprep.subr.mxu0 0.0
    %2102 = vmatpush2.msra.mxu0 0.0
    %2103 = vmatprep.subr.mxu0 0.0
    %2104 = vmatpush2.msra.mxu0 0.0
    %2105 = vmatprep.subr.mxu0 0.0
    %2106 = vmatpush2.msra.mxu0 0.0
    %2107 = vmatprep.subr.mxu0 0.0
    %2108 = vmatpush2.msra.mxu0 0.0
    %2109 = vmatprep.subr.mxu0 0.0
    %2110 = vmatpush2.msra.mxu0 0.0
    %2111 = vmatprep.subr.mxu0 0.0
    %2112 = vmatpush2.msra.mxu0 0.0
    %2113 = vmatprep.subr.mxu0 0.0
    %2114 = vmatpush2.msra.mxu0 0.0
    %2115 = vmatprep.subr.mxu0 0.0
    %2116 = vmatpush2.msra.mxu0 0.0
    %2117 = vmatprep.subr.mxu0 0.0
    %2118 = vmatpush2.msra.mxu0 0.0
    %2119 = vmatprep.subr.mxu0 0.0
    %2120 = vmatpush2.msra.mxu0 0.0
    %2121 = vmatprep.subr.mxu0 0.0
    %2122 = vmatpush2.msra.mxu0 0.0
    %2123 = vmatprep.subr.mxu0 0.0
    %2124 = vmatpush2.msra.mxu0 0.0
    %2125 = vmatprep.subr.mxu0 0.0
    %2126 = vmatpush2.msra.mxu0 0.0
    %2127 = vmatprep.subr.mxu0 0.0
    %2128 = vmatpush2.msra.mxu0 0.0
    %2129 = vmatprep.mubr.f32.mxu0 0.0
    %2130 = vmatmul.mubr.f32.gmra.mxu0 %v1446
    %v2131 = vpop.f32.mrf.mxu0
    %v2132 = vadd.f32 %v2058, %v2131
    %v2133 = vpop.f32.mrf.mxu0
    %2134 = vmatprep.mubr.f32.mxu0 0.0
    %2135 = vmatmul.mubr.f32.gmra.mxu0 %v1547
    %v2136 = vpop.f32.mrf.mxu0
    %v2137 = vadd.f32 %v2058, %v2136
    %v2138 = vpop.f32.mrf.mxu0
    %2139 = vmatprep.mubr.f32.mxu0 0.0
    %2140 = vmatmul.mubr.f32.gmra.mxu0 %v1648
    %v2141 = vpop.f32.mrf.mxu0
    %v2142 = vadd.f32 %v2058, %v2141
    %v2143 = vpop.f32.mrf.mxu0
    %2144 = vmatprep.mubr.f32.mxu0 0.0
    %2145 = vmatmul.mubr.f32.gmra.mxu0 %v1749
    %v2146 = vpop.f32.mrf.mxu0
    %v2147 = vadd.f32 %v2058, %v2146
    %v2148 = vpop.f32.mrf.mxu0
    %2149 = vmatprep.mubr.f32.mxu0 0.0
    %2150 = vmatmul.mubr.f32.gmra.mxu0 %v1850
    %v2151 = vpop.f32.mrf.mxu0
    %v2152 = vadd.f32 %v2058, %v2151
    %v2153 = vpop.f32.mrf.mxu0
    %2154 = vmatprep.mubr.f32.mxu0 0.0
    %2155 = vmatmul.mubr.f32.gmra.mxu0 %v1951
    %v2156 = vpop.f32.mrf.mxu0
    %v2157 = vadd.f32 %v2058, %v2156
    %v2158 = vpop.f32.mrf.mxu0
    %2159 = vmatprep.mubr.f32.mxu0 0.0
    %2160 = vmatmul.mubr.f32.gmra.mxu0 %v2063
    %v2161 = vpop.f32.mrf.mxu0
    %v2162 = vadd.f32 %v2058, %v2161
    %v2163 = vpop.f32.mrf.mxu0
    %2164 = vdwg.mxu0
    %2165 = vst [vmem:[%s8] sm:$0xff] %v2132
    %2166 = vst [vmem:[%s8 + $0x8] sm:$0xff] %v2137
    %2167 = vst [vmem:[%s8 + $0x10] sm:$0xff] %v2142
    %2168 = vst [vmem:[%s8 + $0x18] sm:$0xff] %v2147
    %2169 = vst [vmem:[%s8 + $0x20] sm:$0xff] %v2152
    %2170 = vst [vmem:[%s8 + $0x28] sm:$0xff] %v2157
    %2171 = vst [vmem:[%s8 + $0x30] sm:$0xff] %v2162
    // Predicated region
    $region38: #{bigru_decoder_forward.1} parent=1 // pred_check
      _
    $region39: #{bigru_decoder_forward.1} parent=1 // pred_check_branch
      %2173 = sbr.rel (0) target = $region41
    $region40: #{bigru_decoder_forward.1} parent=1 // pred_region
      _
    $region41: #{bigru_decoder_forward.1} parent=1 // pred_fallthru
      _
    // Predicated region
    $region42: #{bigru_decoder_forward.1} parent=1 // pred_check
      _
    $region43: #{bigru_decoder_forward.1} parent=1 // pred_check_branch
      %2175 = sbr.rel (0) target = $region45
    $region44: #{bigru_decoder_forward.1} parent=1 // pred_region
      _
    $region45: #{bigru_decoder_forward.1} parent=1 // pred_fallthru
      _
    %2176 = vsyncpa [#allocation3], 1

</llo_original>
